<compile_context>
chip_gen: v6e
topology: v6e:2x2x1
jax: 0.10.0
libtpu: 0.0.40
codegen_flags: <defaults>
</compile_context>

<pallas_src>
import functools

import jax
import jax.numpy as jnp
from jax import lax
from jax.experimental import pallas as pl
from jax.experimental.pallas import tpu as pltpu


def _space_nonlocal_kernel(
    x_ref,      # (1, TN, C)  f32  full-resolution positions (theta branch + residual)
    phi_ref,    # (1, M, Ci)  bf16 pooled-branch phi projection (precomputed)
    g_ref,      # (1, M, Ci)  bf16 pooled-branch g projection (precomputed)
    wth_ref,    # (C, Ci)     bf16 theta weight, pre-scaled by dim_inner**-0.5
    wout_ref,   # (Ci, C)     bf16 output weight
    bth_ref,    # (1, Ci)     f32  theta bias, pre-scaled
    bout_ref,   # (1, C)      f32  output bias
    out_ref,    # (1, TN, C)  f32
):
    xf = x_ref[0]                                                          # (TN, C) f32

    # theta 1x1 conv: bf16 operands, f32 accumulation; logit scale already folded in.
    theta = jnp.dot(xf.astype(jnp.bfloat16), wth_ref[...],
                    preferred_element_type=jnp.float32) + bth_ref[...]     # (TN, Ci) f32

    # att[n, m] = <theta[n], phi[m]> — contract dim 1 of both operands (no explicit
    # phi transpose; K is the minor/lane dim of both operands, MXU-native form).
    att = lax.dot_general(
        theta.astype(jnp.bfloat16), phi_ref[0],
        dimension_numbers=(((1,), (1,)), ((), ())),
        preferred_element_type=jnp.float32)                                # (TN, M) f32

    # Softmax over M in f32: single max, single exp, single sum, approx-reciprocal (EUP).
    att = att - jnp.max(att, axis=-1, keepdims=True)
    p = jnp.exp(att)
    p = p * pl.reciprocal(jnp.sum(p, axis=-1, keepdims=True), approx=True)

    # t[n, ci] = sum_m p[n, m] * g[m, ci]   (== torch.matmul(g_x, p_x) transposed)
    t = jnp.dot(p.astype(jnp.bfloat16), g_ref[0],
                preferred_element_type=jnp.float32)                        # (TN, Ci) f32

    # output 1x1 conv + residual (bias add and residual in f32)
    y = jnp.dot(t.astype(jnp.bfloat16), wout_ref[...],
                preferred_element_type=jnp.float32) + bout_ref[...]        # (TN, C) f32
    out_ref[0] = (y + xf).astype(out_ref.dtype)


def _round_up(n, m):
    return ((n + m - 1) // m) * m


def _vmem_capacity_bytes(default=64 * 1024 * 1024):
    """Physical VMEM per TensorCore; conservative (v7x-sized) default if the query fails."""
    try:
        info = pltpu.get_tpu_info()
        return int(getattr(info, "vmem_capacity_bytes", default))
    except Exception:
        return default


def _choose_tiling(n, tn_cap):
    """Pick (tile_n, padded_n).

    Prefers MXU-friendly tiles (multiples of 256, fallback 128) and never silently falls
    back to tn=n for awkward spatial sizes: if no nice divisor exists, n is padded up to
    a multiple of the chosen tile (padded rows are computed on zeros and sliced off).
    """
    if n <= tn_cap:
        np_ = _round_up(n, 8)
        return np_, np_
    for tn in (512, 384, 256, 128):
        if tn <= tn_cap and n % tn == 0:
            return tn, n
    tn = min(256, tn_cap)
    return tn, _round_up(n, tn)


def space_nonlocal(x_nchw, params, dim_inner, max_pool_stride=2, tile_n=None,
                   single_buffer_constants=True):
    """Forward pass of SpaceNonLocal. x_nchw: (B, C, H, W) float32; returns NCHW."""
    B, C, H, W = x_nchw.shape
    wth, wph, wg, wout, bth, bph, bg, bout = params
    assert wout.shape[1] == C, "residual connection requires dim_out == dim_in"
    s = max_pool_stride
    assert H % s == 0 and W % s == 0, "MaxPool2d(stride) path requires H, W divisible by stride"
    Hh, Wh = H // s, W // s
    N, M = H * W, Hh * Wh
    Ci = dim_inner

    # ---- glue: NCHW -> channels-last, flatten spatial -------------------------------
    x_nhwc = jnp.transpose(x_nchw, (0, 2, 3, 1))                           # (B, H, W, C)
    x_flat = x_nhwc.reshape(B, N, C)

    # ---- pooled branch hoisted out of the kernel ------------------------------------
    # 2x2/stride-2 maxpool fused (under jit) with the phi/g 1x1 convs; bf16 operands,
    # f32 accumulation, result stored bf16 (the MXU operand dtype inside the kernel).
    xp = x_nhwc.reshape(B, Hh, s, Wh, s, C).max(axis=(2, 4)).reshape(B, M, C)
    xp_bf = xp.astype(jnp.bfloat16)
    wph_bf = wph.astype(jnp.bfloat16)
    wg_bf = wg.astype(jnp.bfloat16)
    phi = (jnp.einsum("bmc,ck->bmk", xp_bf, wph_bf,
                      preferred_element_type=jnp.float32) + bph).astype(jnp.bfloat16)
    g = (jnp.einsum("bmc,ck->bmk", xp_bf, wg_bf,
                    preferred_element_type=jnp.float32) + bg).astype(jnp.bfloat16)

    # ---- fold the dim_inner**-0.5 logit scale into theta's weight/bias; bf16 weights --
    scale = float(dim_inner) ** -0.5
    wth_k = (wth * scale).astype(jnp.bfloat16)
    bth_k = bth * scale
    wout_k = wout.astype(jnp.bfloat16)
    bout_k = bout

    # ---- per-generation tiling / VMEM caps -------------------------------------------
    vmem_phys = _vmem_capacity_bytes()
    small_vmem = vmem_phys <= 64 * 1024 * 1024          # v7x-class part (64 MiB / TC)
    tn_cap = 256 if small_vmem else 512
    if tile_n is None:
        tn, n_pad = _choose_tiling(N, tn_cap)
    else:
        assert tile_n % 8 == 0, "tile_n must be a multiple of 8"
        tn = tile_n
        n_pad = _round_up(N, tn)
    if n_pad != N:
        x_flat = jnp.pad(x_flat, ((0, 0), (0, n_pad - N), (0, 0)))
    nt = n_pad // tn

    # ---- VMEM estimate (no blanket 2x fudge; constants single-buffered) ---------------
    vmem_est = (
        2 * tn * C * 4                      # x tile, double buffered
        + 2 * tn * C * 4                    # out tile, double buffered
        + 2 * 2 * M * Ci * 2                # phi + g (bf16), double buffered per batch elem
        + 2 * (C * Ci + Ci * C) * 2         # bf16 weights (x2 if not single-buffered, below)
        + 2 * 8 * (Ci + C) * 4              # biases, sublane-padded to 8 rows
        + (2 * tn * M + 3 * tn * Ci + 2 * tn * C) * 4   # att/p + theta/t/y temporaries
    )
    if single_buffer_constants:
        vmem_est -= (C * Ci + Ci * C) * 2 + 8 * (Ci + C) * 4
    cap = (48 if small_vmem else 96) * 1024 * 1024
    vmem_limit = int(min(cap, max(32 * 1024 * 1024, int(1.25 * vmem_est))))

    # ---- advisory cost estimate (phi/g projections now live outside the kernel) -------
    flops = 2 * B * (n_pad * C * Ci + 2 * n_pad * M * Ci + n_pad * Ci * C)
    bytes_accessed = (4 * B * 2 * n_pad * C          # x in + out, f32
                      + 2 * B * 2 * M * Ci           # phi + g, bf16
                      + 2 * 2 * C * Ci               # weights, bf16
                      + 4 * (Ci + C))                # biases, f32
    cost = pl.CostEstimate(flops=flops, transcendentals=B * n_pad * M,
                           bytes_accessed=bytes_accessed)

    # ---- BlockSpecs --------------------------------------------------------------------
    def const_spec(shape):
        # Constant across the whole grid: single-buffer it to save VMEM (Buffered(1)).
        if single_buffer_constants:
            return pl.BlockSpec(shape, lambda b, n: (0, 0),
                                pipeline_mode=pl.Buffered(1))
        return pl.BlockSpec(shape, lambda b, n: (0, 0))

    in_specs = [
        pl.BlockSpec((1, tn, C), lambda b, n: (b, n, 0)),    # x: new tile per grid step
        pl.BlockSpec((1, M, Ci), lambda b, n: (b, 0, 0)),    # phi: resident per batch elem
        pl.BlockSpec((1, M, Ci), lambda b, n: (b, 0, 0)),    # g:   resident per batch elem
        const_spec((C, Ci)),                                 # wth (pre-scaled, bf16)
        const_spec((Ci, C)),                                 # wout (bf16)
        const_spec((1, Ci)),                                 # bth (pre-scaled, f32)
        const_spec((1, C)),                                  # bout (f32)
    ]

    out_flat = pl.pallas_call(
        _space_nonlocal_kernel,
        out_shape=jax.ShapeDtypeStruct((B, n_pad, C), x_flat.dtype),
        grid_spec=pltpu.PrefetchScalarGridSpec(
            num_scalar_prefetch=0,
            grid=(B, nt),
            in_specs=in_specs,
            out_specs=pl.BlockSpec((1, tn, C), lambda b, n: (b, n, 0)),
        ),
        # No cross-iteration scratch anymore -> both axes are independent; on v7x the
        # megacore can split either axis across its two TensorCores.
        compiler_params=pltpu.CompilerParams(
            dimension_semantics=("parallel", "parallel"),
            vmem_limit_bytes=vmem_limit,
        ),
        cost_estimate=cost,
    )(x_flat, phi, g, wth_k, wout_k, bth_k, bout_k)

    if n_pad != N:
        out_flat = out_flat[:, :N, :]
    out_nhwc = out_flat.reshape(B, H, W, C)
    return jnp.transpose(out_nhwc, (0, 3, 1, 2))                           # back to NCHW


def init_params(key, dim_in, dim_inner, dim_out, conv_init_std=0.01):
    """Parameter init matching _init_modules (normal(std) weights, zero bias).

    PyTorch conv weights are (C_out, C_in, 1, 1); stored transposed as (C_in, C_out)
    so the kernel can do x @ W directly.
    """
    k1, k2, k3, k4 = jax.random.split(key, 4)
    wth = conv_init_std * jax.random.normal(k1, (dim_in, dim_inner), jnp.float32)
    wph = conv_init_std * jax.random.normal(k2, (dim_in, dim_inner), jnp.float32)
    wg = conv_init_std * jax.random.normal(k3, (dim_in, dim_inner), jnp.float32)
    wout = conv_init_std * jax.random.normal(k4, (dim_inner, dim_out), jnp.float32)
    bth = jnp.zeros((1, dim_inner), jnp.float32)
    bph = jnp.zeros((1, dim_inner), jnp.float32)
    bg = jnp.zeros((1, dim_inner), jnp.float32)
    bout = jnp.zeros((1, dim_out), jnp.float32)
    return (wth, wph, wg, wout, bth, bph, bg, bout)


def _reference(x_nchw, params, dim_inner, max_pool_stride=2):
    """Pure-JAX f32 reference mirroring the PyTorch forward, for correctness check."""
    wth, wph, wg, wout, bth, bph, bg, bout = params
    B, C, H, W = x_nchw.shape
    s = max_pool_stride
    Hh, Wh = H // s, W // s
    x = jnp.transpose(x_nchw, (0, 2, 3, 1))                  # (B,H,W,C)
    theta = x.reshape(B, H * W, C) @ wth + bth               # (B,N,Ci)
    xp = x.reshape(B, Hh, s, Wh, s, C).max(axis=(2, 4)).reshape(B, Hh * Wh, C)
    phi = xp @ wph + bph                                     # (B,M,Ci)
    g = xp @ wg + bg                                         # (B,M,Ci)
    att = jnp.einsum("bnc,bmc->bnm", theta, phi) * dim_inner ** -0.5
    p = jax.nn.softmax(att, axis=-1)
    t = jnp.einsum("bnm,bmc->bnc", p, g)                     # (B,N,Ci)
    y = t @ wout + bout                                      # (B,N,C)
    out = (y + x.reshape(B, H * W, C)).reshape(B, H, W, C)
    return jnp.transpose(out, (0, 3, 1, 2))


if __name__ == "__main__":
    B, C, H, W = 2, 8, 16, 16       # dim_in = dim_out = 8 (residual requires dim_out == dim_in)
    dim_inner = 4

    key = jax.random.PRNGKey(0)
    kx, kp, kx2 = jax.random.split(key, 3)
    x = jax.random.normal(kx, (B, C, H, W), jnp.float32)
    # Larger init std than the cfg default (0.01) so the attention map is non-trivial
    # and the correctness check is meaningful.
    params = init_params(kp, C, dim_inner, C, conv_init_std=0.1)

    def run(inp, tile_n, single_buffer):
        fwd = jax.jit(functools.partial(space_nonlocal, dim_inner=dim_inner,
                                        tile_n=tile_n,
                                        single_buffer_constants=single_buffer))
        return jax.block_until_ready(fwd(inp, params))

    # tile_n=128 forces 2 N-tiles per batch element so the tiled path is exercised (N=256).
    try:
        out = run(x, 128, True)
        single_buffer = True
    except Exception:
        # pl.Buffered(1) not supported by this jax build — fall back to default buffering.
        out = run(x, 128, False)
        single_buffer = False

    ref = _reference(x, params, dim_inner)
    assert out.shape == (B, C, H, W)
    assert bool(jnp.all(jnp.isfinite(out))), "non-finite output"
    # bf16 MXU operands + approx reciprocal => compare against the f32 reference with a
    # tolerance appropriate for bf16 matmul rounding (documented deviation vs Detectron).
    assert jnp.allclose(out, ref, atol=3e-3, rtol=3e-3), "mismatch vs reference"

    # Second config exercises the pad-the-last-tile path: N = 24*24 = 576 has no
    # 128-multiple divisor, so it is padded to a multiple of the chosen tile and sliced.
    x2 = jax.random.normal(kx2, (1, C, 24, 24), jnp.float32)
    out2 = run(x2, None, single_buffer)
    ref2 = _reference(x2, params, dim_inner)
    assert out2.shape == x2.shape
    assert jnp.allclose(out2, ref2, atol=3e-3, rtol=3e-3), "mismatch vs reference (padded path)"

    print("KERNEL_OK")
</pallas_src>

<mosaic_0001>
module attributes {stable_mosaic.version = 11 : i64} {
  func.func @_space_nonlocal_kernel(%arg0: i32, %arg1: i32, %arg2: memref<1x128x8xf32, #tpu.memory_space<vmem>>, %arg3: memref<1x64x4xbf16, #tpu.memory_space<vmem>>, %arg4: memref<1x64x4xbf16, #tpu.memory_space<vmem>>, %arg5: memref<8x4xbf16, #tpu.memory_space<vmem>>, %arg6: memref<4x8xbf16, #tpu.memory_space<vmem>>, %arg7: memref<1x4xf32, #tpu.memory_space<vmem>>, %arg8: memref<1x8xf32, #tpu.memory_space<vmem>>, %arg9: memref<1x128x8xf32, #tpu.memory_space<vmem>>) attributes {dimension_semantics = [#tpu.dimension_semantics<parallel>, #tpu.dimension_semantics<parallel>], iteration_bounds = array<i64: 2, 2>, scalar_prefetch = 0 : i64, scratch_operands = 0 : i64, tpu.core_type = #tpu.core_type<tc>, window_params = [{transform_indices = @transform_0, window_bounds = array<i64: 1, 128, 8>}, {transform_indices = @transform_1, window_bounds = array<i64: 1, 64, 4>}, {transform_indices = @transform_2, window_bounds = array<i64: 1, 64, 4>}, {pipeline_mode = #tpu.pipeline_mode<synchronous>, transform_indices = @transform_3, window_bounds = array<i64: 8, 4>}, {pipeline_mode = #tpu.pipeline_mode<synchronous>, transform_indices = @transform_4, window_bounds = array<i64: 4, 8>}, {pipeline_mode = #tpu.pipeline_mode<synchronous>, transform_indices = @transform_5, window_bounds = array<i64: 1, 4>}, {pipeline_mode = #tpu.pipeline_mode<synchronous>, transform_indices = @transform_6, window_bounds = array<i64: 1, 8>}, {transform_indices = @transform_7, window_bounds = array<i64: 1, 128, 8>}]} {
    %c0 = arith.constant 0 : index
    %c0_0 = arith.constant 0 : index
    %c0_1 = arith.constant 0 : index
    %0 = vector.load %arg2[%c0, %c0_0, %c0_1] : memref<1x128x8xf32, #tpu.memory_space<vmem>>, vector<1x128x8xf32>
    %1 = vector.shape_cast %0 : vector<1x128x8xf32> to vector<128x8xf32>
    %2 = arith.truncf %1 : vector<128x8xf32> to vector<128x8xbf16>
    %c0_2 = arith.constant 0 : index
    %c0_3 = arith.constant 0 : index
    %3 = vector.load %arg5[%c0_2, %c0_3] : memref<8x4xbf16, #tpu.memory_space<vmem>>, vector<8x4xbf16>
    %cst = arith.constant dense<0.000000e+00> : vector<128x4xf32>
    %4 = tpu.matmul %2, %3, %cst {dimension_numbers = #tpu.dot_dimension_numbers<[1], [0], [0], [1], [0, 0, 1, 1], [], []>} : vector<128x8xbf16>, vector<8x4xbf16>, vector<128x4xf32> -> vector<128x4xf32>
    %c0_4 = arith.constant 0 : index
    %c0_5 = arith.constant 0 : index
    %5 = vector.load %arg7[%c0_4, %c0_5] : memref<1x4xf32, #tpu.memory_space<vmem>>, vector<1x4xf32>
    %6 = vector.broadcast %5 : vector<1x4xf32> to vector<128x4xf32>
    %7 = arith.addf %4, %6 : vector<128x4xf32>
    %8 = arith.truncf %7 : vector<128x4xf32> to vector<128x4xbf16>
    %c0_6 = arith.constant 0 : index
    %c0_7 = arith.constant 0 : index
    %c0_8 = arith.constant 0 : index
    %9 = vector.load %arg3[%c0_6, %c0_7, %c0_8] : memref<1x64x4xbf16, #tpu.memory_space<vmem>>, vector<1x64x4xbf16>
    %10 = vector.shape_cast %9 : vector<1x64x4xbf16> to vector<64x4xbf16>
    %cst_9 = arith.constant dense<0.000000e+00> : vector<128x64xf32>
    %11 = tpu.matmul %8, %10, %cst_9 {dimension_numbers = #tpu.dot_dimension_numbers<[1], [1], [0], [0], [0, 0, 1, 0], [], []>} : vector<128x4xbf16>, vector<64x4xbf16>, vector<128x64xf32> -> vector<128x64xf32>
    %cst_10 = arith.constant dense<0xFF800000> : vector<128xf32>
    %12 = vector.multi_reduction <maximumf>, %11, %cst_10 [1] : vector<128x64xf32> to vector<128xf32>
    %13 = vector.shape_cast %12 : vector<128xf32> to vector<128x1xf32>
    %14 = vector.broadcast %13 : vector<128x1xf32> to vector<128x64xf32>
    %15 = arith.subf %11, %14 : vector<128x64xf32>
    %16 = math.exp %15 : vector<128x64xf32>
    %cst_11 = arith.constant dense<0.000000e+00> : vector<128xf32>
    %17 = vector.multi_reduction <add>, %16, %cst_11 [1] : vector<128x64xf32> to vector<128xf32>
    %18 = vector.shape_cast %17 : vector<128xf32> to vector<128x1xf32>
    %19 = tpu.reciprocal %18 {approx = true} : vector<128x1xf32> -> vector<128x1xf32>
    %20 = vector.broadcast %19 : vector<128x1xf32> to vector<128x64xf32>
    %21 = arith.mulf %16, %20 : vector<128x64xf32>
    %22 = arith.truncf %21 : vector<128x64xf32> to vector<128x64xbf16>
    %c0_12 = arith.constant 0 : index
    %c0_13 = arith.constant 0 : index
    %c0_14 = arith.constant 0 : index
    %23 = vector.load %arg4[%c0_12, %c0_13, %c0_14] : memref<1x64x4xbf16, #tpu.memory_space<vmem>>, vector<1x64x4xbf16>
    %24 = vector.shape_cast %23 : vector<1x64x4xbf16> to vector<64x4xbf16>
    %cst_15 = arith.constant dense<0.000000e+00> : vector<128x4xf32>
    %25 = tpu.matmul %22, %24, %cst_15 {dimension_numbers = #tpu.dot_dimension_numbers<[1], [0], [0], [1], [0, 0, 1, 1], [], []>} : vector<128x64xbf16>, vector<64x4xbf16>, vector<128x4xf32> -> vector<128x4xf32>
    %26 = arith.truncf %25 : vector<128x4xf32> to vector<128x4xbf16>
    %c0_16 = arith.constant 0 : index
    %c0_17 = arith.constant 0 : index
    %27 = vector.load %arg6[%c0_16, %c0_17] : memref<4x8xbf16, #tpu.memory_space<vmem>>, vector<4x8xbf16>
    %cst_18 = arith.constant dense<0.000000e+00> : vector<128x8xf32>
    %28 = tpu.matmul %26, %27, %cst_18 {dimension_numbers = #tpu.dot_dimension_numbers<[1], [0], [0], [1], [0, 0, 1, 1], [], []>} : vector<128x4xbf16>, vector<4x8xbf16>, vector<128x8xf32> -> vector<128x8xf32>
    %c0_19 = arith.constant 0 : index
    %c0_20 = arith.constant 0 : index
    %29 = vector.load %arg8[%c0_19, %c0_20] : memref<1x8xf32, #tpu.memory_space<vmem>>, vector<1x8xf32>
    %30 = vector.broadcast %29 : vector<1x8xf32> to vector<128x8xf32>
    %31 = arith.addf %28, %30 : vector<128x8xf32>
    %32 = arith.addf %31, %1 : vector<128x8xf32>
    %c0_21 = arith.constant 0 : index
    %c0_22 = arith.constant 0 : index
    %c0_23 = arith.constant 0 : index
    %33 = vector.load %arg9[%c0_21, %c0_22, %c0_23] : memref<1x128x8xf32, #tpu.memory_space<vmem>>, vector<1x128x8xf32>
    %34 = vector.shape_cast %33 : vector<1x128x8xf32> to vector<128x8xf32>
    %35 = vector.shape_cast %32 : vector<128x8xf32> to vector<1x128x8xf32>
    tpu.vector_store %arg9[%c0_21, %c0_22, %c0_23], %35 {strides = array<i32>} : memref<1x128x8xf32, #tpu.memory_space<vmem>>, vector<1x128x8xf32>,
    return
  }
  func.func @transform_0(%arg0: i32, %arg1: i32) -> (i32, i32, i32) {
    %c0_i32 = arith.constant 0 : i32
    %c0_i32_0 = arith.constant 0 : i32
    return %arg0, %arg1, %c0_i32 : i32, i32, i32
  }
  func.func @transform_1(%arg0: i32, %arg1: i32) -> (i32, i32, i32) {
    %c0_i32 = arith.constant 0 : i32
    %c0_i32_0 = arith.constant 0 : i32
    %c0_i32_1 = arith.constant 0 : i32
    return %arg0, %c0_i32, %c0_i32_0 : i32, i32, i32
  }
  func.func @transform_2(%arg0: i32, %arg1: i32) -> (i32, i32, i32) {
    %c0_i32 = arith.constant 0 : i32
    %c0_i32_0 = arith.constant 0 : i32
    %c0_i32_1 = arith.constant 0 : i32
    return %arg0, %c0_i32, %c0_i32_0 : i32, i32, i32
  }
  func.func @transform_3(%arg0: i32, %arg1: i32) -> (i32, i32) {
    %c0_i32 = arith.constant 0 : i32
    %c0_i32_0 = arith.constant 0 : i32
    %c0_i32_1 = arith.constant 0 : i32
    return %c0_i32, %c0_i32_0 : i32, i32
  }
  func.func @transform_4(%arg0: i32, %arg1: i32) -> (i32, i32) {
    %c0_i32 = arith.constant 0 : i32
    %c0_i32_0 = arith.constant 0 : i32
    %c0_i32_1 = arith.constant 0 : i32
    return %c0_i32, %c0_i32_0 : i32, i32
  }
  func.func @transform_5(%arg0: i32, %arg1: i32) -> (i32, i32) {
    %c0_i32 = arith.constant 0 : i32
    %c0_i32_0 = arith.constant 0 : i32
    %c0_i32_1 = arith.constant 0 : i32
    return %c0_i32, %c0_i32_0 : i32, i32
  }
  func.func @transform_6(%arg0: i32, %arg1: i32) -> (i32, i32) {
    %c0_i32 = arith.constant 0 : i32
    %c0_i32_0 = arith.constant 0 : i32
    %c0_i32_1 = arith.constant 0 : i32
    return %c0_i32, %c0_i32_0 : i32, i32
  }
  func.func @transform_7(%arg0: i32, %arg1: i32) -> (i32, i32, i32) {
    %c0_i32 = arith.constant 0 : i32
    %c0_i32_0 = arith.constant 0 : i32
    return %arg0, %arg1, %c0_i32 : i32, i32, i32
  }
}

module attributes {stable_mosaic.version = 11 : i64} {
  func.func @_space_nonlocal_kernel(%arg0: i32, %arg1: i32, %arg2: memref<1x128x8xf32, #tpu.memory_space<vmem>>, %arg3: memref<1x64x4xbf16, #tpu.memory_space<vmem>>, %arg4: memref<1x64x4xbf16, #tpu.memory_space<vmem>>, %arg5: memref<8x4xbf16, #tpu.memory_space<vmem>>, %arg6: memref<4x8xbf16, #tpu.memory_space<vmem>>, %arg7: memref<1x4xf32, #tpu.memory_space<vmem>>, %arg8: memref<1x8xf32, #tpu.memory_space<vmem>>, %arg9: memref<1x128x8xf32, #tpu.memory_space<vmem>>) attributes {dimension_semantics = [#tpu.dimension_semantics<parallel>, #tpu.dimension_semantics<parallel>], iteration_bounds = array<i64: 2, 2>, scalar_prefetch = 0 : i64, scratch_operands = 0 : i64, tpu.core_type = #tpu.core_type<tc>, window_params = [{transform_indices = @transform_0, window_bounds = array<i64: 1, 128, 8>}, {transform_indices = @transform_1, window_bounds = array<i64: 1, 64, 4>}, {transform_indices = @transform_2, window_bounds = array<i64: 1, 64, 4>}, {pipeline_mode = #tpu.pipeline_mode<synchronous>, transform_indices = @transform_3, window_bounds = array<i64: 8, 4>}, {pipeline_mode = #tpu.pipeline_mode<synchronous>, transform_indices = @transform_4, window_bounds = array<i64: 4, 8>}, {pipeline_mode = #tpu.pipeline_mode<synchronous>, transform_indices = @transform_5, window_bounds = array<i64: 1, 4>}, {pipeline_mode = #tpu.pipeline_mode<synchronous>, transform_indices = @transform_6, window_bounds = array<i64: 1, 8>}, {transform_indices = @transform_7, window_bounds = array<i64: 1, 128, 8>}]} {
    %c0 = arith.constant 0 : index
    %c0_0 = arith.constant 0 : index
    %c0_1 = arith.constant 0 : index
    %0 = vector.load %arg2[%c0, %c0_0, %c0_1] : memref<1x128x8xf32, #tpu.memory_space<vmem>>, vector<1x128x8xf32>
    %1 = vector.shape_cast %0 : vector<1x128x8xf32> to vector<128x8xf32>
    %2 = arith.truncf %1 : vector<128x8xf32> to vector<128x8xbf16>
    %c0_2 = arith.constant 0 : index
    %c0_3 = arith.constant 0 : index
    %3 = vector.load %arg5[%c0_2, %c0_3] : memref<8x4xbf16, #tpu.memory_space<vmem>>, vector<8x4xbf16>
    %cst = arith.constant dense<0.000000e+00> : vector<128x4xf32>
    %4 = tpu.matmul %2, %3, %cst {dimension_numbers = #tpu.dot_dimension_numbers<[1], [0], [0], [1], [0, 0, 1, 1], [], []>} : vector<128x8xbf16>, vector<8x4xbf16>, vector<128x4xf32> -> vector<128x4xf32>
    %c0_4 = arith.constant 0 : index
    %c0_5 = arith.constant 0 : index
    %5 = vector.load %arg7[%c0_4, %c0_5] : memref<1x4xf32, #tpu.memory_space<vmem>>, vector<1x4xf32>
    %6 = vector.broadcast %5 : vector<1x4xf32> to vector<128x4xf32>
    %7 = arith.addf %4, %6 : vector<128x4xf32>
    %8 = arith.truncf %7 : vector<128x4xf32> to vector<128x4xbf16>
    %c0_6 = arith.constant 0 : index
    %c0_7 = arith.constant 0 : index
    %c0_8 = arith.constant 0 : index
    %9 = vector.load %arg3[%c0_6, %c0_7, %c0_8] : memref<1x64x4xbf16, #tpu.memory_space<vmem>>, vector<1x64x4xbf16>
    %10 = vector.shape_cast %9 : vector<1x64x4xbf16> to vector<64x4xbf16>
    %cst_9 = arith.constant dense<0.000000e+00> : vector<128x64xf32>
    %11 = tpu.matmul %8, %10, %cst_9 {dimension_numbers = #tpu.dot_dimension_numbers<[1], [1], [0], [0], [0, 0, 1, 0], [], []>} : vector<128x4xbf16>, vector<64x4xbf16>, vector<128x64xf32> -> vector<128x64xf32>
    %cst_10 = arith.constant dense<0xFF800000> : vector<128xf32>
    %12 = vector.multi_reduction <maximumf>, %11, %cst_10 [1] : vector<128x64xf32> to vector<128xf32>
    %13 = vector.shape_cast %12 : vector<128xf32> to vector<128x1xf32>
    %14 = vector.broadcast %13 : vector<128x1xf32> to vector<128x64xf32>
    %15 = arith.subf %11, %14 : vector<128x64xf32>
    %16 = math.exp %15 : vector<128x64xf32>
    %cst_11 = arith.constant dense<0.000000e+00> : vector<128xf32>
    %17 = vector.multi_reduction <add>, %16, %cst_11 [1] : vector<128x64xf32> to vector<128xf32>
    %18 = vector.shape_cast %17 : vector<128xf32> to vector<128x1xf32>
    %19 = tpu.reciprocal %18 {approx = true} : vector<128x1xf32> -> vector<128x1xf32>
    %20 = vector.broadcast %19 : vector<128x1xf32> to vector<128x64xf32>
    %21 = arith.mulf %16, %20 : vector<128x64xf32>
    %22 = arith.truncf %21 : vector<128x64xf32> to vector<128x64xbf16>
    %c0_12 = arith.constant 0 : index
    %c0_13 = arith.constant 0 : index
    %c0_14 = arith.constant 0 : index
    %23 = vector.load %arg4[%c0_12, %c0_13, %c0_14] : memref<1x64x4xbf16, #tpu.memory_space<vmem>>, vector<1x64x4xbf16>
    %24 = vector.shape_cast %23 : vector<1x64x4xbf16> to vector<64x4xbf16>
    %cst_15 = arith.constant dense<0.000000e+00> : vector<128x4xf32>
    %25 = tpu.matmul %22, %24, %cst_15 {dimension_numbers = #tpu.dot_dimension_numbers<[1], [0], [0], [1], [0, 0, 1, 1], [], []>} : vector<128x64xbf16>, vector<64x4xbf16>, vector<128x4xf32> -> vector<128x4xf32>
    %26 = arith.truncf %25 : vector<128x4xf32> to vector<128x4xbf16>
    %c0_16 = arith.constant 0 : index
    %c0_17 = arith.constant 0 : index
    %27 = vector.load %arg6[%c0_16, %c0_17] : memref<4x8xbf16, #tpu.memory_space<vmem>>, vector<4x8xbf16>
    %cst_18 = arith.constant dense<0.000000e+00> : vector<128x8xf32>
    %28 = tpu.matmul %26, %27, %cst_18 {dimension_numbers = #tpu.dot_dimension_numbers<[1], [0], [0], [1], [0, 0, 1, 1], [], []>} : vector<128x4xbf16>, vector<4x8xbf16>, vector<128x8xf32> -> vector<128x8xf32>
    %c0_19 = arith.constant 0 : index
    %c0_20 = arith.constant 0 : index
    %29 = vector.load %arg8[%c0_19, %c0_20] : memref<1x8xf32, #tpu.memory_space<vmem>>, vector<1x8xf32>
    %30 = vector.broadcast %29 : vector<1x8xf32> to vector<128x8xf32>
    %31 = arith.addf %28, %30 : vector<128x8xf32>
    %32 = arith.addf %31, %1 : vector<128x8xf32>
    %c0_21 = arith.constant 0 : index
    %c0_22 = arith.constant 0 : index
    %c0_23 = arith.constant 0 : index
    %33 = vector.load %arg9[%c0_21, %c0_22, %c0_23] : memref<1x128x8xf32, #tpu.memory_space<vmem>>, vector<1x128x8xf32>
    %34 = vector.shape_cast %33 : vector<1x128x8xf32> to vector<128x8xf32>
    %35 = vector.shape_cast %32 : vector<128x8xf32> to vector<1x128x8xf32>
    tpu.vector_store %arg9[%c0_21, %c0_22, %c0_23], %35 {strides = array<i32>} : memref<1x128x8xf32, #tpu.memory_space<vmem>>, vector<1x128x8xf32>,
    return
  }
  func.func @transform_0(%arg0: i32, %arg1: i32) -> (i32, i32, i32) {
    %c0_i32 = arith.constant 0 : i32
    %c0_i32_0 = arith.constant 0 : i32
    return %arg0, %arg1, %c0_i32 : i32, i32, i32
  }
  func.func @transform_1(%arg0: i32, %arg1: i32) -> (i32, i32, i32) {
    %c0_i32 = arith.constant 0 : i32
    %c0_i32_0 = arith.constant 0 : i32
    %c0_i32_1 = arith.constant 0 : i32
    return %arg0, %c0_i32, %c0_i32_0 : i32, i32, i32
  }
  func.func @transform_2(%arg0: i32, %arg1: i32) -> (i32, i32, i32) {
    %c0_i32 = arith.constant 0 : i32
    %c0_i32_0 = arith.constant 0 : i32
    %c0_i32_1 = arith.constant 0 : i32
    return %arg0, %c0_i32, %c0_i32_0 : i32, i32, i32
  }
  func.func @transform_3(%arg0: i32, %arg1: i32) -> (i32, i32) {
    %c0_i32 = arith.constant 0 : i32
    %c0_i32_0 = arith.constant 0 : i32
    %c0_i32_1 = arith.constant 0 : i32
    return %c0_i32, %c0_i32_0 : i32, i32
  }
  func.func @transform_4(%arg0: i32, %arg1: i32) -> (i32, i32) {
    %c0_i32 = arith.constant 0 : i32
    %c0_i32_0 = arith.constant 0 : i32
    %c0_i32_1 = arith.constant 0 : i32
    return %c0_i32, %c0_i32_0 : i32, i32
  }
  func.func @transform_5(%arg0: i32, %arg1: i32) -> (i32, i32) {
    %c0_i32 = arith.constant 0 : i32
    %c0_i32_0 = arith.constant 0 : i32
    %c0_i32_1 = arith.constant 0 : i32
    return %c0_i32, %c0_i32_0 : i32, i32
  }
  func.func @transform_6(%arg0: i32, %arg1: i32) -> (i32, i32) {
    %c0_i32 = arith.constant 0 : i32
    %c0_i32_0 = arith.constant 0 : i32
    %c0_i32_1 = arith.constant 0 : i32
    return %c0_i32, %c0_i32_0 : i32, i32
  }
  func.func @transform_7(%arg0: i32, %arg1: i32) -> (i32, i32, i32) {
    %c0_i32 = arith.constant 0 : i32
    %c0_i32_0 = arith.constant 0 : i32
    return %arg0, %arg1, %c0_i32 : i32, i32, i32
  }
}

</mosaic_0001>

<llo_original>
// kernel: space_nonlocal.1
$region0: #{space_nonlocal.1}
  #allocation0 [shape = 'u32[]', space=smem, size = 0x4, offset = 0x4, fixed_abs, tag = 'smem constant byte address 0x4 - core index']
  #allocation1 [shape = 'u32[144,128]{1,0:T(1,128)}', space=vmem, size = 0x12000, scoped, tag = 'internal scratch']
  %s0 = inlined_call_operand.vmem [shape: f32[2,256,8], index: 0, kind: input, shape index: {}]
  %s1 = inlined_call_operand.vmem [shape: bf16[2,64,4], index: 1, kind: input, shape index: {}]
  %s2 = inlined_call_operand.vmem [shape: bf16[2,64,4], index: 2, kind: input, shape index: {}]
  %s3 = inlined_call_operand.vmem [shape: bf16[8,4], index: 3, kind: input, shape index: {}]
  %s4 = inlined_call_operand.vmem [shape: bf16[4,8], index: 4, kind: input, shape index: {}]
  %s5 = inlined_call_operand.vmem [shape: f32[1,4], index: 5, kind: input, shape index: {}]
  %s6 = inlined_call_operand.vmem [shape: f32[1,8], index: 6, kind: input, shape index: {}]
  %s7 = inlined_call_operand.vmem [shape: f32[2,256,8], index: 7, kind: output, shape index: {}]
  %s8 = sld [smem:[#allocation0]]
  $region61: #{space_nonlocal.1} parent=0
    _
  %s10 = ssub.s32 1, %s8
  %s11 = scalar_select 0, %s10, %s8
  loop: start=0, step=1, limit=6
  $region2: #{space_nonlocal.1} parent=0 // loop_pre_header
    _
  $region3: #{space_nonlocal.1} parent=0 // loop_header
    %s13 = sphi 0, %s17
    %p14 = scmp.ge.s32.totalorder %s13, 6
    %s20 = sphi 0, %s32
    %s21 = sphi 0, %s28
    %s22 = sphi 0, %s20
    %s23 = sphi 0, %s21
    %s24 = sphi 0, %s22
    %s25 = sphi 0, %s23
    %s37 = sphi 0, %s39
    %s40 = sphi 0, %s37
    %s41 = sphi 0, %s40
    %s57 = sphi 0, %s41
    %s63 = sphi 0, %s65
    %s66 = sphi 0, %s63
    %s67 = sphi 0, %s66
    %s83 = sphi 0, %s67
    %s89 = sphi 0, %s91
    %s92 = sphi 0, %s89
    %s93 = sphi 0, %s92
    %s109 = sphi 0, %s93
    %s113 = sphi 0, %s113
    %s115 = sphi 0, %s113
    %s116 = sphi 0, %s115
    %s130 = sphi 0, %s116
    %s134 = sphi 0, %s134
    %s136 = sphi 0, %s134
    %s137 = sphi 0, %s136
    %s151 = sphi 0, %s137
    %s155 = sphi 0, %s155
    %s157 = sphi 0, %s155
    %s158 = sphi 0, %s157
    %s172 = sphi 0, %s158
    %s176 = sphi 0, %s176
    %s178 = sphi 0, %s176
    %s179 = sphi 0, %s178
    %s193 = sphi 0, %s179
    %s201 = sphi 0, %s203
    %s204 = sphi 0, %s201
    %s205 = sphi 0, %s204
    %s221 = sphi 0, %s205
  $region4: #{space_nonlocal.1} parent=0 // loop_header_branch
    %16 = sbr.rel (%p14) target = $region8
  $region5: #{space_nonlocal.1} parent=0 // loop_body
    %s18 = ssub.s32 %s13, 1
    %s19 = ssub.s32 %s13, 2
    %s26 = sadd.s32 1, %s21
    %p27 = scmp.ge.s32.totalorder %s26, 2
    %s28 = scalar_select %p27, 0, %s26
    %s29 = sadd.s32 1, %s20
    %s30 = scalar_select %p27, %s29, %s20
    %p31 = scmp.ge.s32.totalorder %s30, 2
    %s32 = scalar_select %p31, 0, %s30
    %s33 = ssub.s32 %s20, %s32
    %s34 = ssub.s32 %s21, %s28
    %s35 = sor.u32 %s33, %s34
    %p36 = scmp.eq.s32.totalorder %s35, 0
    %s38 = sadd.s32 %s37, 1
    %s39 = scalar_select %p36, %s37, %s38
    %p42 = pneg %p36
    %p43 = scmp.eq.s32.totalorder %s13, 3
    %p44 = por %p42, %p43
    %p45 = scmp.ne.s32.totalorder %s37, %s40
    %p46 = scmp.eq.s32.totalorder %s13, 0
    %p47 = por %p45, %p46
    %p48 = scmp.ne.s32.totalorder %s37, %s40
    %p49 = scmp.eq.s32.totalorder %s18, 3
    %p50 = por %p48, %p49
    %p51 = scmp.ne.s32.totalorder %s40, %s41
    %p52 = scmp.eq.s32.totalorder %s18, 0
    %p53 = por %p51, %p52
    %p54 = scmp.ne.s32.totalorder %s40, %s41
    %p55 = scmp.eq.s32.totalorder %s19, 3
    %p56 = por %p54, %p55
    %p58 = scmp.ne.s32.totalorder %s41, %s57
    %p59 = scmp.eq.s32.totalorder %s19, 0
    %p60 = por %p58, %p59
    %s61 = ssub.s32 %s20, %s32
    %p62 = scmp.eq.s32.totalorder %s61, 0
    %s64 = sadd.s32 %s63, 1
    %s65 = scalar_select %p62, %s63, %s64
    %p68 = pneg %p62
    %p69 = scmp.eq.s32.totalorder %s13, 3
    %p70 = por %p68, %p69
    %p71 = scmp.ne.s32.totalorder %s63, %s66
    %p72 = scmp.eq.s32.totalorder %s13, 0
    %p73 = por %p71, %p72
    %p74 = scmp.ne.s32.totalorder %s63, %s66
    %p75 = scmp.eq.s32.totalorder %s18, 3
    %p76 = por %p74, %p75
    %p77 = scmp.ne.s32.totalorder %s66, %s67
    %p78 = scmp.eq.s32.totalorder %s18, 0
    %p79 = por %p77, %p78
    %p80 = scmp.ne.s32.totalorder %s66, %s67
    %p81 = scmp.eq.s32.totalorder %s19, 3
    %p82 = por %p80, %p81
    %p84 = scmp.ne.s32.totalorder %s67, %s83
    %p85 = scmp.eq.s32.totalorder %s19, 0
    %p86 = por %p84, %p85
    %s87 = ssub.s32 %s20, %s32
    %p88 = scmp.eq.s32.totalorder %s87, 0
    %s90 = sadd.s32 %s89, 1
    %s91 = scalar_select %p88, %s89, %s90
    %p94 = pneg %p88
    %p95 = scmp.eq.s32.totalorder %s13, 3
    %p96 = por %p94, %p95
    %p97 = scmp.ne.s32.totalorder %s89, %s92
    %p98 = scmp.eq.s32.totalorder %s13, 0
    %p99 = por %p97, %p98
    %p100 = scmp.ne.s32.totalorder %s89, %s92
    %p101 = scmp.eq.s32.totalorder %s18, 3
    %p102 = por %p100, %p101
    %p103 = scmp.ne.s32.totalorder %s92, %s93
    %p104 = scmp.eq.s32.totalorder %s18, 0
    %p105 = por %p103, %p104
    %p106 = scmp.ne.s32.totalorder %s92, %s93
    %p107 = scmp.eq.s32.totalorder %s19, 3
    %p108 = por %p106, %p107
    %p110 = scmp.ne.s32.totalorder %s93, %s109
    %p111 = scmp.eq.s32.totalorder %s19, 0
    %p112 = por %p110, %p111
    %s114 = sadd.s32 %s113, 1
    %p117 = scmp.eq.s32.totalorder %s13, 3
    %p118 = scmp.ne.s32.totalorder %s113, %s115
    %p119 = scmp.eq.s32.totalorder %s13, 0
    %p120 = por %p118, %p119
    %p121 = scmp.ne.s32.totalorder %s113, %s115
    %p122 = scmp.eq.s32.totalorder %s18, 3
    %p123 = por %p121, %p122
    %p124 = scmp.ne.s32.totalorder %s115, %s116
    %p125 = scmp.eq.s32.totalorder %s18, 0
    %p126 = por %p124, %p125
    %p127 = scmp.ne.s32.totalorder %s115, %s116
    %p128 = scmp.eq.s32.totalorder %s19, 3
    %p129 = por %p127, %p128
    %p131 = scmp.ne.s32.totalorder %s116, %s130
    %p132 = scmp.eq.s32.totalorder %s19, 0
    %p133 = por %p131, %p132
    %s135 = sadd.s32 %s134, 1
    %p138 = scmp.eq.s32.totalorder %s13, 3
    %p139 = scmp.ne.s32.totalorder %s134, %s136
    %p140 = scmp.eq.s32.totalorder %s13, 0
    %p141 = por %p139, %p140
    %p142 = scmp.ne.s32.totalorder %s134, %s136
    %p143 = scmp.eq.s32.totalorder %s18, 3
    %p144 = por %p142, %p143
    %p145 = scmp.ne.s32.totalorder %s136, %s137
    %p146 = scmp.eq.s32.totalorder %s18, 0
    %p147 = por %p145, %p146
    %p148 = scmp.ne.s32.totalorder %s136, %s137
    %p149 = scmp.eq.s32.totalorder %s19, 3
    %p150 = por %p148, %p149
    %p152 = scmp.ne.s32.totalorder %s137, %s151
    %p153 = scmp.eq.s32.totalorder %s19, 0
    %p154 = por %p152, %p153
    %s156 = sadd.s32 %s155, 1
    %p159 = scmp.eq.s32.totalorder %s13, 3
    %p160 = scmp.ne.s32.totalorder %s155, %s157
    %p161 = scmp.eq.s32.totalorder %s13, 0
    %p162 = por %p160, %p161
    %p163 = scmp.ne.s32.totalorder %s155, %s157
    %p164 = scmp.eq.s32.totalorder %s18, 3
    %p165 = por %p163, %p164
    %p166 = scmp.ne.s32.totalorder %s157, %s158
    %p167 = scmp.eq.s32.totalorder %s18, 0
    %p168 = por %p166, %p167
    %p169 = scmp.ne.s32.totalorder %s157, %s158
    %p170 = scmp.eq.s32.totalorder %s19, 3
    %p171 = por %p169, %p170
    %p173 = scmp.ne.s32.totalorder %s158, %s172
    %p174 = scmp.eq.s32.totalorder %s19, 0
    %p175 = por %p173, %p174
    %s177 = sadd.s32 %s176, 1
    %p180 = scmp.eq.s32.totalorder %s13, 3
    %p181 = scmp.ne.s32.totalorder %s176, %s178
    %p182 = scmp.eq.s32.totalorder %s13, 0
    %p183 = por %p181, %p182
    %p184 = scmp.ne.s32.totalorder %s176, %s178
    %p185 = scmp.eq.s32.totalorder %s18, 3
    %p186 = por %p184, %p185
    %p187 = scmp.ne.s32.totalorder %s178, %s179
    %p188 = scmp.eq.s32.totalorder %s18, 0
    %p189 = por %p187, %p188
    %p190 = scmp.ne.s32.totalorder %s178, %s179
    %p191 = scmp.eq.s32.totalorder %s19, 3
    %p192 = por %p190, %p191
    %p194 = scmp.ne.s32.totalorder %s179, %s193
    %p195 = scmp.eq.s32.totalorder %s19, 0
    %p196 = por %p194, %p195
    %s197 = ssub.s32 %s20, %s32
    %s198 = ssub.s32 %s21, %s28
    %s199 = sor.u32 %s197, %s198
    %p200 = scmp.eq.s32.totalorder %s199, 0
    %s202 = sadd.s32 %s201, 1
    %s203 = scalar_select %p200, %s201, %s202
    %p206 = pneg %p200
    %p207 = scmp.eq.s32.totalorder %s13, 3
    %p208 = por %p206, %p207
    %p209 = scmp.ne.s32.totalorder %s201, %s204
    %p210 = scmp.eq.s32.totalorder %s13, 0
    %p211 = por %p209, %p210
    %p212 = scmp.ne.s32.totalorder %s201, %s204
    %p213 = scmp.eq.s32.totalorder %s18, 3
    %p214 = por %p212, %p213
    %p215 = scmp.ne.s32.totalorder %s204, %s205
    %p216 = scmp.eq.s32.totalorder %s18, 0
    %p217 = por %p215, %p216
    %p218 = scmp.ne.s32.totalorder %s204, %s205
    %p219 = scmp.eq.s32.totalorder %s19, 3
    %p220 = por %p218, %p219
    %p222 = scmp.ne.s32.totalorder %s205, %s221
    %p223 = scmp.eq.s32.totalorder %s19, 0
    %p224 = por %p222, %p223
    %p225 = scmp.le.s32.totalorder 1, %s13
    %p226 = scmp.lt.s32.totalorder %s13, 5
    %p227 = pnand %p225, %p226
    %p228 = pneg %p227
    // Predicated region
    $region9: #{space_nonlocal.1} parent=5 // pred_check
      _
    $region10: #{space_nonlocal.1} parent=5 // pred_check_branch
      %230 = sbr.rel (%p227) target = $region12
    $region11: #{space_nonlocal.1} parent=5 // pred_region
      %s231 = ssub.s32 %s13, 1
      // Predicated region
      $region13: #{space_nonlocal.1} parent=11 // pred_check
        %p232 = pneg %p126
      $region14: #{space_nonlocal.1} parent=11 // pred_check_branch
        %234 = sbr.rel (%p232) target = $region16
      $region15: #{space_nonlocal.1} parent=11 // pred_region
        _
      $region16: #{space_nonlocal.1} parent=11 // pred_fallthru
        _
      // Predicated region
      $region17: #{space_nonlocal.1} parent=11 // pred_check
        %p235 = pneg %p147
      $region18: #{space_nonlocal.1} parent=11 // pred_check_branch
        %237 = sbr.rel (%p235) target = $region20
      $region19: #{space_nonlocal.1} parent=11 // pred_region
        _
      $region20: #{space_nonlocal.1} parent=11 // pred_fallthru
        _
      // Predicated region
      $region21: #{space_nonlocal.1} parent=11 // pred_check
        %p238 = pneg %p168
      $region22: #{space_nonlocal.1} parent=11 // pred_check_branch
        %240 = sbr.rel (%p238) target = $region24
      $region23: #{space_nonlocal.1} parent=11 // pred_region
        _
      $region24: #{space_nonlocal.1} parent=11 // pred_fallthru
        _
      // Predicated region
      $region25: #{space_nonlocal.1} parent=11 // pred_check
        %p241 = pneg %p189
      $region26: #{space_nonlocal.1} parent=11 // pred_check_branch
        %243 = sbr.rel (%p241) target = $region28
      $region27: #{space_nonlocal.1} parent=11 // pred_region
        _
      $region28: #{space_nonlocal.1} parent=11 // pred_fallthru
        _
    $region12: #{space_nonlocal.1} parent=5 // pred_fallthru
      _
    %p244 = scmp.lt.s32.totalorder %s13, 4
    // Predicated region
    $region29: #{space_nonlocal.1} parent=5 // pred_check
      %p245 = pneg %p244
    $region30: #{space_nonlocal.1} parent=5 // pred_check_branch
      %247 = sbr.rel (%p245) target = $region32
    $region31: #{space_nonlocal.1} parent=5 // pred_region
      // Predicated region
      $region33: #{space_nonlocal.1} parent=31 // pred_check
        %p248 = pneg %p47
      $region34: #{space_nonlocal.1} parent=31 // pred_check_branch
        %250 = sbr.rel (%p248) target = $region36
      $region35: #{space_nonlocal.1} parent=31 // pred_region
        %s251 = smul.u32 16, %s21
        %p252 = scmp.lt.s32.totalorder %s20, 1
        %s253 = scalar_select %p252, %s20, 1
        %p254 = scmp.lt.s32.totalorder %s251, 31
        %s255 = scalar_select %p254, %s251, 31
        %s256 = smul.addr %s253, 32
        %s257 = sadd.s32 %s255, %s256
        %s258 = smul.addr %s257, 8
        %s259 = scalar_lea.vmem %s0, %s258
        %s260 = smul.u32 16, %s21
      $region36: #{space_nonlocal.1} parent=31 // pred_fallthru
        _
      // Predicated region
      $region37: #{space_nonlocal.1} parent=31 // pred_check
        %p261 = pneg %p73
      $region38: #{space_nonlocal.1} parent=31 // pred_check_branch
        %263 = sbr.rel (%p261) target = $region40
      $region39: #{space_nonlocal.1} parent=31 // pred_region
        %p264 = scmp.lt.s32.totalorder %s20, 1
        %s265 = scalar_select %p264, %s20, 1
        %s266 = smul.addr %s265, 8
        %s267 = smul.addr %s266, 4
        %s268 = scalar_lea.vmem %s1, %s267
      $region40: #{space_nonlocal.1} parent=31 // pred_fallthru
        _
      // Predicated region
      $region41: #{space_nonlocal.1} parent=31 // pred_check
        %p269 = pneg %p99
      $region42: #{space_nonlocal.1} parent=31 // pred_check_branch
        %271 = sbr.rel (%p269) target = $region44
      $region43: #{space_nonlocal.1} parent=31 // pred_region
        %p272 = scmp.lt.s32.totalorder %s20, 1
        %s273 = scalar_select %p272, %s20, 1
        %s274 = smul.addr %s273, 8
        %s275 = smul.addr %s274, 4
        %s276 = scalar_lea.vmem %s2, %s275
      $region44: #{space_nonlocal.1} parent=31 // pred_fallthru
        _
    $region32: #{space_nonlocal.1} parent=5 // pred_fallthru
      _
    %p277 = scmp.le.s32.totalorder 1, %s13
    %p278 = scmp.lt.s32.totalorder %s13, 5
    %p279 = pnand %p277, %p278
    %p280 = pneg %p279
    // Predicated region
    $region45: #{space_nonlocal.1} parent=5 // pred_check
      _
    $region46: #{space_nonlocal.1} parent=5 // pred_check_branch
      %282 = sbr.rel (%p279) target = $region48
    $region47: #{space_nonlocal.1} parent=5 // pred_region
      %s283 = ssub.s32 %s13, 1
      %s284 = smul.u32 16, %s23
      %p285 = scmp.lt.s32.totalorder %s22, 1
      %s286 = scalar_select %p285, %s22, 1
      %p287 = scmp.lt.s32.totalorder %s284, 31
      %s288 = scalar_select %p287, %s284, 31
      %s289 = smul.addr %s286, 32
      %s290 = sadd.s32 %s288, %s289
      %s291 = smul.addr %s290, 8
      %s292 = scalar_lea.vmem %s0, %s291
      %p293 = pneg %p53
      %p294 = pneg %p50
      %p295 = scmp.lt.s32.totalorder %s22, 1
      %s296 = scalar_select %p295, %s22, 1
      %s297 = smul.addr %s296, 8
      %s298 = smul.addr %s297, 4
      %s299 = scalar_lea.vmem %s1, %s298
      %p300 = pneg %p79
      %p301 = pneg %p76
      %p302 = scmp.lt.s32.totalorder %s22, 1
      %s303 = scalar_select %p302, %s22, 1
      %s304 = smul.addr %s303, 8
      %s305 = smul.addr %s304, 4
      %s306 = scalar_lea.vmem %s2, %s305
      %p307 = pneg %p105
      %p308 = pneg %p102
      %p309 = pneg %p126
      %p310 = pneg %p123
      %p311 = pneg %p147
      %p312 = pneg %p144
      %p313 = pneg %p168
      %p314 = pneg %p165
      %p315 = pneg %p189
      %p316 = pneg %p186
      %p317 = pneg %p217
      %p318 = pneg %p214
      %s319 = smul.u32 16, %s23
      %p320 = scmp.lt.s32.totalorder %s22, 1
      %s321 = scalar_select %p320, %s22, 1
      %p322 = scmp.lt.s32.totalorder %s319, 31
      %s323 = scalar_select %p322, %s319, 31
      %s324 = smul.addr %s321, 32
      %s325 = sadd.s32 %s323, %s324
      %s326 = smul.addr %s325, 8
      %s327 = scalar_lea.vmem %s7, %s326
      %s328 = smul.u32 16, %s23
      %p329 = scmp.lt.s32.totalorder %s22, 1
      %s330 = scalar_select %p329, %s22, 1
      %p331 = scmp.lt.s32.totalorder %s328, 31
      %s332 = scalar_select %p331, %s328, 31
      %s333 = smul.addr %s330, 32
      %s334 = sadd.s32 %s332, %s333
      %s335 = smul.addr %s334, 8
      %s336 = scalar_lea.vmem %s0, %s335
      %s337 = smul.u32 16, %s23
      %p338 = scmp.lt.s32.totalorder %s22, 1
      %s339 = scalar_select %p338, %s22, 1
      %s340 = smul.addr %s339, 8
      %s341 = smul.addr %s340, 4
      %s342 = scalar_lea.vmem %s1, %s341
      %p343 = scmp.lt.s32.totalorder %s22, 1
      %s344 = scalar_select %p343, %s22, 1
      %s345 = smul.addr %s344, 8
      %s346 = smul.addr %s345, 4
      %s347 = scalar_lea.vmem %s2, %s346
      %s348 = smul.u32 16, %s23
      %p349 = scmp.lt.s32.totalorder %s22, 1
      %s350 = scalar_select %p349, %s22, 1
      %p351 = scmp.lt.s32.totalorder %s348, 31
      %s352 = scalar_select %p351, %s348, 31
      %s353 = smul.addr %s350, 32
      %s354 = sadd.s32 %s352, %s353
      %s355 = smul.addr %s354, 8
      %s356 = scalar_lea.vmem %s7, %s355
      %s357 = smul.u32 16, %s23
      %v359 = vld [vmem:[%s336] sm:$0xff]
      %v360 = vld [vmem:[%s336 + $0x8] sm:$0xff]
      %v361 = vld [vmem:[%s336 + $0x10] sm:$0xff]
      %v362 = vld [vmem:[%s336 + $0x18] sm:$0xff]
      %v363 = vld [vmem:[%s336 + $0x20] sm:$0xff]
      %v364 = vld [vmem:[%s336 + $0x28] sm:$0xff]
      %v365 = vld [vmem:[%s336 + $0x30] sm:$0xff]
      %v366 = vld [vmem:[%s336 + $0x38] sm:$0xff]
      %v367 = vld [vmem:[%s336 + $0x40] sm:$0xff]
      %v368 = vld [vmem:[%s336 + $0x48] sm:$0xff]
      %v369 = vld [vmem:[%s336 + $0x50] sm:$0xff]
      %v370 = vld [vmem:[%s336 + $0x58] sm:$0xff]
      %v371 = vld [vmem:[%s336 + $0x60] sm:$0xff]
      %v372 = vld [vmem:[%s336 + $0x68] sm:$0xff]
      %v373 = vld [vmem:[%s336 + $0x70] sm:$0xff]
      %v374 = vld [vmem:[%s336 + $0x78] sm:$0xff]
      %v375 = vpack.c.bf16 %v360, %v359
      %v376 = vpack.c.bf16 %v362, %v361
      %v377 = vpack.c.bf16 %v364, %v363
      %v378 = vpack.c.bf16 %v366, %v365
      %v379 = vpack.c.bf16 %v368, %v367
      %v380 = vpack.c.bf16 %v370, %v369
      %v381 = vpack.c.bf16 %v372, %v371
      %v382 = vpack.c.bf16 %v374, %v373
      %v383 = vld [vmem:[%s3] sm:$0xf]
      %v384 = vld [vmem:[%s5] sm:$0x1]
      %v386 = vlaneseq
      %v387 = vshrl.u32 %v386, 7
      %v388 = vsub.s32 0, %v387
      %v389 = vrot.slane %v384, %v388
      %vm391 = vcmask 64512
      %v393 = vsel %vm391, %v375, 0
      %v396 = vsel %vm391, %v376, 0
      %v399 = vsel %vm391, %v377, 0
      %v402 = vsel %vm391, %v378, 0
      %v405 = vsel %vm391, %v379, 0
      %v408 = vsel %vm391, %v380, 0
      %v411 = vsel %vm391, %v381, 0
      %v414 = vsel %vm391, %v382, 0
      %vm416 = vcmask 1043456
      %v418 = vsel %vm416, %v383, 0
      %420 = vmatprep.subr.bf16.mxu0 0
      %421 = vmatpush1.bf16.msra.mxu0 0
      %422 = vmatprep.subr.bf16.mxu0 0
      %423 = vmatpush1.bf16.msra.mxu0 0
      %424 = vmatprep.subr.bf16.mxu0 0
      %425 = vmatpush1.bf16.msra.mxu0 0
      %426 = vmatprep.subr.bf16.mxu0 0
      %427 = vmatpush1.bf16.msra.mxu0 0
      %428 = vmatprep.subr.bf16.mxu0 0
      %429 = vmatpush1.bf16.msra.mxu0 0
      %430 = vmatprep.subr.bf16.mxu0 0
      %431 = vmatpush1.bf16.msra.mxu0 0
      %432 = vmatprep.subr.bf16.mxu0 0
      %433 = vmatpush1.bf16.msra.mxu0 0
      %434 = vmatprep.subr.bf16.mxu0 0
      %435 = vmatpush1.bf16.msra.mxu0 %v418
      %436 = vmatprep.subr.bf16.mxu0 0
      %437 = vmatpush2.bf16.msra.mxu0 0
      %438 = vmatprep.subr.bf16.mxu0 0
      %439 = vmatpush2.bf16.msra.mxu0 0
      %440 = vmatprep.subr.bf16.mxu0 0
      %441 = vmatpush2.bf16.msra.mxu0 0
      %442 = vmatprep.subr.bf16.mxu0 0
      %443 = vmatpush2.bf16.msra.mxu0 0
      %444 = vmatprep.subr.bf16.mxu0 0
      %445 = vmatpush2.bf16.msra.mxu0 0
      %446 = vmatprep.subr.bf16.mxu0 0
      %447 = vmatpush2.bf16.msra.mxu0 0
      %448 = vmatprep.subr.bf16.mxu0 0
      %449 = vmatpush2.bf16.msra.mxu0 0
      %450 = vmatprep.subr.bf16.mxu0 0
      %451 = vmatpush2.bf16.msra.mxu0 0
      %452 = vmatprep.mubr.bf16.mxu0 0
      %453 = vmatmul.mubr.bf16.gmra.mxu0 %v393
      %v454 = vpop.f32.mrf.mxu0
      %v455 = vadd.f32 %v389, %v454
      %v456 = vpop.f32.mrf.mxu0
      %v457 = vpop.f32.mrf.mxu0
      %v458 = vadd.f32 %v389, %v457
      %v459 = vpop.f32.mrf.mxu0
      %460 = vmatprep.mubr.bf16.mxu0 0
      %461 = vmatmul.mubr.bf16.gmra.mxu0 %v396
      %v462 = vpop.f32.mrf.mxu0
      %v463 = vadd.f32 %v389, %v462
      %v464 = vpop.f32.mrf.mxu0
      %v465 = vpop.f32.mrf.mxu0
      %v466 = vadd.f32 %v389, %v465
      %v467 = vpop.f32.mrf.mxu0
      %468 = vmatprep.mubr.bf16.mxu0 0
      %469 = vmatmul.mubr.bf16.gmra.mxu0 %v399
      %v470 = vpop.f32.mrf.mxu0
      %v471 = vadd.f32 %v389, %v470
      %v472 = vpop.f32.mrf.mxu0
      %v473 = vpop.f32.mrf.mxu0
      %v474 = vadd.f32 %v389, %v473
      %v475 = vpop.f32.mrf.mxu0
      %476 = vmatprep.mubr.bf16.mxu0 0
      %477 = vmatmul.mubr.bf16.gmra.mxu0 %v402
      %v478 = vpop.f32.mrf.mxu0
      %v479 = vadd.f32 %v389, %v478
      %v480 = vpop.f32.mrf.mxu0
      %v481 = vpop.f32.mrf.mxu0
      %v482 = vadd.f32 %v389, %v481
      %v483 = vpop.f32.mrf.mxu0
      %484 = vmatprep.mubr.bf16.mxu0 0
      %485 = vmatmul.mubr.bf16.gmra.mxu0 %v405
      %v486 = vpop.f32.mrf.mxu0
      %v487 = vadd.f32 %v389, %v486
      %v488 = vpop.f32.mrf.mxu0
      %v489 = vpop.f32.mrf.mxu0
      %v490 = vadd.f32 %v389, %v489
      %v491 = vpop.f32.mrf.mxu0
      %492 = vmatprep.mubr.bf16.mxu0 0
      %493 = vmatmul.mubr.bf16.gmra.mxu0 %v408
      %v494 = vpop.f32.mrf.mxu0
      %v495 = vadd.f32 %v389, %v494
      %v496 = vpop.f32.mrf.mxu0
      %v497 = vpop.f32.mrf.mxu0
      %v498 = vadd.f32 %v389, %v497
      %v499 = vpop.f32.mrf.mxu0
      %500 = vmatprep.mubr.bf16.mxu0 0
      %501 = vmatmul.mubr.bf16.gmra.mxu0 %v411
      %v502 = vpop.f32.mrf.mxu0
      %v503 = vadd.f32 %v389, %v502
      %v504 = vpop.f32.mrf.mxu0
      %v505 = vpop.f32.mrf.mxu0
      %v506 = vadd.f32 %v389, %v505
      %v507 = vpop.f32.mrf.mxu0
      %508 = vmatprep.mubr.bf16.mxu0 0
      %509 = vmatmul.mubr.bf16.gmra.mxu0 %v414
      %v510 = vpop.f32.mrf.mxu0
      %v511 = vadd.f32 %v389, %v510
      %v512 = vpop.f32.mrf.mxu0
      %v513 = vpop.f32.mrf.mxu0
      %v514 = vadd.f32 %v389, %v513
      %v515 = vpop.f32.mrf.mxu0
      %516 = vdwg.mxu0
      %v517 = vpack.c.bf16 %v458, %v455
      %v518 = vpack.c.bf16 %v466, %v463
      %v519 = vpack.c.bf16 %v474, %v471
      %v520 = vpack.c.bf16 %v482, %v479
      %v521 = vpack.c.bf16 %v490, %v487
      %v522 = vpack.c.bf16 %v498, %v495
      %v523 = vpack.c.bf16 %v506, %v503
      %v524 = vpack.c.bf16 %v514, %v511
      %v525 = vld [vmem:[%s342] sm:$0xf]
      %v526 = vld [vmem:[%s342 + $0x4] sm:$0xf]
      %v527 = vld [vmem:[%s342 + $0x8] sm:$0xf]
      %v528 = vld [vmem:[%s342 + $0xc] sm:$0xf]
      %v529 = vld [vmem:[%s342 + $0x10] sm:$0xf]
      %v530 = vld [vmem:[%s342 + $0x14] sm:$0xf]
      %v531 = vld [vmem:[%s342 + $0x18] sm:$0xf]
      %v532 = vld [vmem:[%s342 + $0x1c] sm:$0xf]
      %v541 = vunpack.c.l.b16 %v525
      %v542 = vunpack.c.l.b16 %v526
      %v543 = vunpack.c.l.b16 %v527
      %v544 = vunpack.c.l.b16 %v528
      %v545 = vunpack.c.l.b16 %v529
      %v546 = vunpack.c.l.b16 %v530
      %v547 = vunpack.c.l.b16 %v531
      %v548 = vunpack.c.l.b16 %v532
      %v549 = vpack.c.b16 %v542, %v541
      %v550 = vpack.c.b16 %v544, %v543
      %v551 = vpack.c.b16 %v546, %v545
      %v552 = vpack.c.b16 %v548, %v547
      %vm553 = vcmask 31744
      %v555 = vsel %vm553, %v517, 0
      %v558 = vsel %vm553, %v518, 0
      %v561 = vsel %vm553, %v519, 0
      %v564 = vsel %vm553, %v520, 0
      %v567 = vsel %vm553, %v521, 0
      %v570 = vsel %vm553, %v522, 0
      %v573 = vsel %vm553, %v523, 0
      %v576 = vsel %vm553, %v524, 0
      %v579 = vsel %vm553, %v549, 0
      %v582 = vsel %vm553, %v550, 0
      %v585 = vsel %vm553, %v551, 0
      %v588 = vsel %vm553, %v552, 0
      %590 = vmatprep.subr.bf16.mxu0 0
      %591 = vmatpush1.bf16.xpose.msra.mxu0 0
      %592 = vmatprep.subr.bf16.mxu0 0
      %593 = vmatpush1.bf16.xpose.msra.mxu0 0
      %594 = vmatprep.subr.bf16.mxu0 0
      %595 = vmatpush1.bf16.xpose.msra.mxu0 0
      %596 = vmatprep.subr.bf16.mxu0 0
      %597 = vmatpush1.bf16.xpose.msra.mxu0 0
      %598 = vmatprep.subr.bf16.mxu0 0
      %599 = vmatpush1.bf16.xpose.msra.mxu0 %v588
      %600 = vmatprep.subr.bf16.mxu0 0
      %601 = vmatpush1.bf16.xpose.msra.mxu0 %v585
      %602 = vmatprep.subr.bf16.mxu0 0
      %603 = vmatpush1.bf16.xpose.msra.mxu0 %v582
      %604 = vmatprep.subr.bf16.mxu0 0
      %605 = vmatpush1.bf16.xpose.msra.mxu0 %v579
      %606 = vmatprep.subr.bf16.mxu0 0
      %607 = vmatpush2.bf16.xpose.msra.mxu0 0
      %608 = vmatprep.subr.bf16.mxu0 0
      %609 = vmatpush2.bf16.xpose.msra.mxu0 0
      %610 = vmatprep.subr.bf16.mxu0 0
      %611 = vmatpush2.bf16.xpose.msra.mxu0 0
      %612 = vmatprep.subr.bf16.mxu0 0
      %613 = vmatpush2.bf16.xpose.msra.mxu0 0
      %614 = vmatprep.subr.bf16.mxu0 0
      %615 = vmatpush2.bf16.xpose.msra.mxu0 0
      %616 = vmatprep.subr.bf16.mxu0 0
      %617 = vmatpush2.bf16.xpose.msra.mxu0 0
      %618 = vmatprep.subr.bf16.mxu0 0
      %619 = vmatpush2.bf16.xpose.msra.mxu0 0
      %620 = vmatprep.subr.bf16.mxu0 0
      %621 = vmatpush2.bf16.xpose.msra.mxu0 0
      %622 = vmatprep.mubr.bf16.mxu0 0
      %623 = vmatmul.mubr.bf16.gmra.mxu0 %v555
      %v624 = vpop.f32.mrf.mxu0
      %v625 = vadd.f32 0.0, %v624
      %v626 = vpop.f32.mrf.mxu0
      %v627 = vpop.f32.mrf.mxu0
      %v628 = vadd.f32 0.0, %v627
      %v629 = vpop.f32.mrf.mxu0
      %630 = vmatprep.mubr.bf16.mxu0 0
      %631 = vmatmul.mubr.bf16.gmra.mxu0 %v558
      %v632 = vpop.f32.mrf.mxu0
      %v633 = vadd.f32 0.0, %v632
      %v634 = vpop.f32.mrf.mxu0
      %v635 = vpop.f32.mrf.mxu0
      %v636 = vadd.f32 0.0, %v635
      %v637 = vpop.f32.mrf.mxu0
      %638 = vmatprep.mubr.bf16.mxu0 0
      %639 = vmatmul.mubr.bf16.gmra.mxu0 %v561
      %v640 = vpop.f32.mrf.mxu0
      %v641 = vadd.f32 0.0, %v640
      %v642 = vpop.f32.mrf.mxu0
      %v643 = vpop.f32.mrf.mxu0
      %v644 = vadd.f32 0.0, %v643
      %v645 = vpop.f32.mrf.mxu0
      %646 = vmatprep.mubr.bf16.mxu0 0
      %647 = vmatmul.mubr.bf16.gmra.mxu0 %v564
      %v648 = vpop.f32.mrf.mxu0
      %v649 = vadd.f32 0.0, %v648
      %v650 = vpop.f32.mrf.mxu0
      %v651 = vpop.f32.mrf.mxu0
      %v652 = vadd.f32 0.0, %v651
      %v653 = vpop.f32.mrf.mxu0
      %654 = vmatprep.mubr.bf16.mxu0 0
      %655 = vmatmul.mubr.bf16.gmra.mxu0 %v567
      %v656 = vpop.f32.mrf.mxu0
      %v657 = vadd.f32 0.0, %v656
      %v658 = vpop.f32.mrf.mxu0
      %v659 = vpop.f32.mrf.mxu0
      %v660 = vadd.f32 0.0, %v659
      %v661 = vpop.f32.mrf.mxu0
      %662 = vmatprep.mubr.bf16.mxu0 0
      %663 = vmatmul.mubr.bf16.gmra.mxu0 %v570
      %v664 = vpop.f32.mrf.mxu0
      %v665 = vadd.f32 0.0, %v664
      %v666 = vpop.f32.mrf.mxu0
      %v667 = vpop.f32.mrf.mxu0
      %v668 = vadd.f32 0.0, %v667
      %v669 = vpop.f32.mrf.mxu0
      %670 = vmatprep.mubr.bf16.mxu0 0
      %671 = vmatmul.mubr.bf16.gmra.mxu0 %v573
      %v672 = vpop.f32.mrf.mxu0
      %v673 = vadd.f32 0.0, %v672
      %v674 = vpop.f32.mrf.mxu0
      %v675 = vpop.f32.mrf.mxu0
      %v676 = vadd.f32 0.0, %v675
      %v677 = vpop.f32.mrf.mxu0
      %678 = vmatprep.mubr.bf16.mxu0 0
      %679 = vmatmul.mubr.bf16.gmra.mxu0 %v576
      %v680 = vpop.f32.mrf.mxu0
      %v681 = vadd.f32 0.0, %v680
      %v682 = vpop.f32.mrf.mxu0
      %v683 = vpop.f32.mrf.mxu0
      %v684 = vadd.f32 0.0, %v683
      %v685 = vpop.f32.mrf.mxu0
      %686 = vdwg.mxu0
      %vm687 = vcmask 523264
      %v688 = vsel %vm687, %v625, -inf
      %689 = vmax.xlane.f32.xlu0 %v688
      %v690 = vpop.xlane.xlu0 %689
      %v691 = vsel %vm687, %v628, -inf
      %692 = vmax.xlane.f32.xlu0 %v691
      %v693 = vpop.xlane.xlu0 %692
      %v694 = vsel %vm687, %v633, -inf
      %695 = vmax.xlane.f32.xlu0 %v694
      %v696 = vpop.xlane.xlu0 %695
      %v697 = vsel %vm687, %v636, -inf
      %698 = vmax.xlane.f32.xlu0 %v697
      %v699 = vpop.xlane.xlu0 %698
      %v700 = vsel %vm687, %v641, -inf
      %701 = vmax.xlane.f32.xlu0 %v700
      %v702 = vpop.xlane.xlu0 %701
      %v703 = vsel %vm687, %v644, -inf
      %704 = vmax.xlane.f32.xlu0 %v703
      %v705 = vpop.xlane.xlu0 %704
      %v706 = vsel %vm687, %v649, -inf
      %707 = vmax.xlane.f32.xlu0 %v706
      %v708 = vpop.xlane.xlu0 %707
      %v709 = vsel %vm687, %v652, -inf
      %710 = vmax.xlane.f32.xlu0 %v709
      %v711 = vpop.xlane.xlu0 %710
      %v712 = vsel %vm687, %v657, -inf
      %713 = vmax.xlane.f32.xlu0 %v712
      %v714 = vpop.xlane.xlu0 %713
      %v715 = vsel %vm687, %v660, -inf
      %716 = vmax.xlane.f32.xlu0 %v715
      %v717 = vpop.xlane.xlu0 %716
      %v718 = vsel %vm687, %v665, -inf
      %719 = vmax.xlane.f32.xlu0 %v718
      %v720 = vpop.xlane.xlu0 %719
      %v721 = vsel %vm687, %v668, -inf
      %722 = vmax.xlane.f32.xlu0 %v721
      %v723 = vpop.xlane.xlu0 %722
      %v724 = vsel %vm687, %v673, -inf
      %725 = vmax.xlane.f32.xlu0 %v724
      %v726 = vpop.xlane.xlu0 %725
      %v727 = vsel %vm687, %v676, -inf
      %728 = vmax.xlane.f32.xlu0 %v727
      %v729 = vpop.xlane.xlu0 %728
      %v730 = vsel %vm687, %v681, -inf
      %731 = vmax.xlane.f32.xlu0 %v730
      %v732 = vpop.xlane.xlu0 %731
      %v733 = vsel %vm687, %v684, -inf
      %734 = vmax.xlane.f32.xlu0 %v733
      %v735 = vpop.xlane.xlu0 %734
      %v736 = vsub.f32 %v625, %v690
      %v737 = vsub.f32 %v628, %v693
      %v738 = vsub.f32 %v633, %v696
      %v739 = vsub.f32 %v636, %v699
      %v740 = vsub.f32 %v641, %v702
      %v741 = vsub.f32 %v644, %v705
      %v742 = vsub.f32 %v649, %v708
      %v743 = vsub.f32 %v652, %v711
      %v744 = vsub.f32 %v657, %v714
      %v745 = vsub.f32 %v660, %v717
      %v746 = vsub.f32 %v665, %v720
      %v747 = vsub.f32 %v668, %v723
      %v748 = vsub.f32 %v673, %v726
      %v749 = vsub.f32 %v676, %v729
      %v750 = vsub.f32 %v681, %v732
      %v751 = vsub.f32 %v684, %v735
      %v752 = vmul.f32 %v736, 1.442695
      %v753 = vpow.pop %v752
      %v754 = vmul.f32 %v737, 1.442695
      %v755 = vpow.pop %v754
      %v756 = vmul.f32 %v738, 1.442695
      %v757 = vpow.pop %v756
      %v758 = vmul.f32 %v739, 1.442695
      %v759 = vpow.pop %v758
      %v760 = vmul.f32 %v740, 1.442695
      %v761 = vpow.pop %v760
      %v762 = vmul.f32 %v741, 1.442695
      %v763 = vpow.pop %v762
      %v764 = vmul.f32 %v742, 1.442695
      %v765 = vpow.pop %v764
      %v766 = vmul.f32 %v743, 1.442695
      %v767 = vpow.pop %v766
      %v768 = vmul.f32 %v744, 1.442695
      %v769 = vpow.pop %v768
      %v770 = vmul.f32 %v745, 1.442695
      %v771 = vpow.pop %v770
      %v772 = vmul.f32 %v746, 1.442695
      %v773 = vpow.pop %v772
      %v774 = vmul.f32 %v747, 1.442695
      %v775 = vpow.pop %v774
      %v776 = vmul.f32 %v748, 1.442695
      %v777 = vpow.pop %v776
      %v778 = vmul.f32 %v749, 1.442695
      %v779 = vpow.pop %v778
      %v780 = vmul.f32 %v750, 1.442695
      %v781 = vpow.pop %v780
      %v782 = vmul.f32 %v751, 1.442695
      %v783 = vpow.pop %v782
      %v784 = vsel %vm687, %v753, 0.0
      %785 = vadd.xlane.f32.xlu0 %v784
      %v786 = vpop.xlane.xlu0 %785
      %v787 = vsel %vm687, %v755, 0.0
      %788 = vadd.xlane.f32.xlu0 %v787
      %v789 = vpop.xlane.xlu0 %788
      %v790 = vsel %vm687, %v757, 0.0
      %791 = vadd.xlane.f32.xlu0 %v790
      %v792 = vpop.xlane.xlu0 %791
      %v793 = vsel %vm687, %v759, 0.0
      %794 = vadd.xlane.f32.xlu0 %v793
      %v795 = vpop.xlane.xlu0 %794
      %v796 = vsel %vm687, %v761, 0.0
      %797 = vadd.xlane.f32.xlu0 %v796
      %v798 = vpop.xlane.xlu0 %797
      %v799 = vsel %vm687, %v763, 0.0
      %800 = vadd.xlane.f32.xlu0 %v799
      %v801 = vpop.xlane.xlu0 %800
      %v802 = vsel %vm687, %v765, 0.0
      %803 = vadd.xlane.f32.xlu0 %v802
      %v804 = vpop.xlane.xlu0 %803
      %v805 = vsel %vm687, %v767, 0.0
      %806 = vadd.xlane.f32.xlu0 %v805
      %v807 = vpop.xlane.xlu0 %806
      %v808 = vsel %vm687, %v769, 0.0
      %809 = vadd.xlane.f32.xlu0 %v808
      %v810 = vpop.xlane.xlu0 %809
      %v811 = vsel %vm687, %v771, 0.0
      %812 = vadd.xlane.f32.xlu0 %v811
      %v813 = vpop.xlane.xlu0 %812
      %v814 = vsel %vm687, %v773, 0.0
      %815 = vadd.xlane.f32.xlu0 %v814
      %v816 = vpop.xlane.xlu0 %815
      %v817 = vsel %vm687, %v775, 0.0
      %818 = vadd.xlane.f32.xlu0 %v817
      %v819 = vpop.xlane.xlu0 %818
      %v820 = vsel %vm687, %v777, 0.0
      %821 = vadd.xlane.f32.xlu0 %v820
      %v822 = vpop.xlane.xlu0 %821
      %v823 = vsel %vm687, %v779, 0.0
      %824 = vadd.xlane.f32.xlu0 %v823
      %v825 = vpop.xlane.xlu0 %824
      %v826 = vsel %vm687, %v781, 0.0
      %827 = vadd.xlane.f32.xlu0 %v826
      %v828 = vpop.xlane.xlu0 %827
      %v829 = vsel %vm687, %v783, 0.0
      %830 = vadd.xlane.f32.xlu0 %v829
      %v831 = vpop.xlane.xlu0 %830
      %v832 = vrcp.pop %v786
      %v833 = vrcp.pop %v789
      %v834 = vrcp.pop %v792
      %v835 = vrcp.pop %v795
      %v836 = vrcp.pop %v798
      %v837 = vrcp.pop %v801
      %v838 = vrcp.pop %v804
      %v839 = vrcp.pop %v807
      %v840 = vrcp.pop %v810
      %v841 = vrcp.pop %v813
      %v842 = vrcp.pop %v816
      %v843 = vrcp.pop %v819
      %v844 = vrcp.pop %v822
      %v845 = vrcp.pop %v825
      %v846 = vrcp.pop %v828
      %v847 = vrcp.pop %v831
      %v848 = vmul.f32 %v753, %v832
      %v849 = vmul.f32 %v755, %v833
      %v850 = vmul.f32 %v757, %v834
      %v851 = vmul.f32 %v759, %v835
      %v852 = vmul.f32 %v761, %v836
      %v853 = vmul.f32 %v763, %v837
      %v854 = vmul.f32 %v765, %v838
      %v855 = vmul.f32 %v767, %v839
      %v856 = vmul.f32 %v769, %v840
      %v857 = vmul.f32 %v771, %v841
      %v858 = vmul.f32 %v773, %v842
      %v859 = vmul.f32 %v775, %v843
      %v860 = vmul.f32 %v777, %v844
      %v861 = vmul.f32 %v779, %v845
      %v862 = vmul.f32 %v781, %v846
      %v863 = vmul.f32 %v783, %v847
      %v864 = vpack.c.bf16 %v849, %v848
      %v865 = vpack.c.bf16 %v851, %v850
      %v866 = vpack.c.bf16 %v853, %v852
      %v867 = vpack.c.bf16 %v855, %v854
      %v868 = vpack.c.bf16 %v857, %v856
      %v869 = vpack.c.bf16 %v859, %v858
      %v870 = vpack.c.bf16 %v861, %v860
      %v871 = vpack.c.bf16 %v863, %v862
      %v872 = vld [vmem:[%s347] sm:$0xf]
      %v873 = vld [vmem:[%s347 + $0x4] sm:$0xf]
      %v874 = vld [vmem:[%s347 + $0x8] sm:$0xf]
      %v875 = vld [vmem:[%s347 + $0xc] sm:$0xf]
      %v876 = vld [vmem:[%s347 + $0x10] sm:$0xf]
      %v877 = vld [vmem:[%s347 + $0x14] sm:$0xf]
      %v878 = vld [vmem:[%s347 + $0x18] sm:$0xf]
      %v879 = vld [vmem:[%s347 + $0x1c] sm:$0xf]
      %v888 = vunpack.c.l.b16 %v872
      %v889 = vunpack.c.l.b16 %v873
      %v890 = vunpack.c.l.b16 %v874
      %v891 = vunpack.c.l.b16 %v875
      %v892 = vunpack.c.l.b16 %v876
      %v893 = vunpack.c.l.b16 %v877
      %v894 = vunpack.c.l.b16 %v878
      %v895 = vunpack.c.l.b16 %v879
      %v896 = vpack.c.b16 %v889, %v888
      %v897 = vpack.c.b16 %v891, %v890
      %v898 = vpack.c.b16 %v893, %v892
      %v899 = vpack.c.b16 %v895, %v894
      %v905 = vsel %vm687, %v864, 0
      %v908 = vsel %vm687, %v865, 0
      %v911 = vsel %vm687, %v866, 0
      %v914 = vsel %vm687, %v867, 0
      %v917 = vsel %vm687, %v868, 0
      %v920 = vsel %vm687, %v869, 0
      %v923 = vsel %vm687, %v870, 0
      %v926 = vsel %vm687, %v871, 0
      %928 = vmatprep.subr.bf16.mxu0 0
      %929 = vmatpush1.bf16.msra.mxu0 0
      %930 = vmatprep.subr.bf16.mxu0 0
      %931 = vmatpush1.bf16.msra.mxu0 0
      %932 = vmatprep.subr.bf16.mxu0 0
      %933 = vmatpush1.bf16.msra.mxu0 0
      %934 = vmatprep.subr.bf16.mxu0 0
      %935 = vmatpush1.bf16.msra.mxu0 0
      %936 = vmatprep.subr.bf16.mxu0 0
      %937 = vmatpush1.bf16.msra.mxu0 %v899
      %938 = vmatprep.subr.bf16.mxu0 0
      %939 = vmatpush1.bf16.msra.mxu0 %v898
      %940 = vmatprep.subr.bf16.mxu0 0
      %941 = vmatpush1.bf16.msra.mxu0 %v897
      %942 = vmatprep.subr.bf16.mxu0 0
      %943 = vmatpush1.bf16.msra.mxu0 %v896
      %944 = vmatprep.subr.bf16.mxu0 0
      %945 = vmatpush2.bf16.msra.mxu0 0
      %946 = vmatprep.subr.bf16.mxu0 0
      %947 = vmatpush2.bf16.msra.mxu0 0
      %948 = vmatprep.subr.bf16.mxu0 0
      %949 = vmatpush2.bf16.msra.mxu0 0
      %950 = vmatprep.subr.bf16.mxu0 0
      %951 = vmatpush2.bf16.msra.mxu0 0
      %952 = vmatprep.subr.bf16.mxu0 0
      %953 = vmatpush2.bf16.msra.mxu0 0
      %954 = vmatprep.subr.bf16.mxu0 0
      %955 = vmatpush2.bf16.msra.mxu0 0
      %956 = vmatprep.subr.bf16.mxu0 0
      %957 = vmatpush2.bf16.msra.mxu0 0
      %958 = vmatprep.subr.bf16.mxu0 0
      %959 = vmatpush2.bf16.msra.mxu0 0
      %960 = vmatprep.mubr.bf16.mxu0 0
      %961 = vmatmul.mubr.bf16.gmra.mxu0 %v905
      %v962 = vpop.f32.mrf.mxu0
      %v963 = vadd.f32 0.0, %v962
      %v964 = vpop.f32.mrf.mxu0
      %v965 = vpop.f32.mrf.mxu0
      %v966 = vadd.f32 0.0, %v965
      %v967 = vpop.f32.mrf.mxu0
      %968 = vmatprep.mubr.bf16.mxu0 0
      %969 = vmatmul.mubr.bf16.gmra.mxu0 %v908
      %v970 = vpop.f32.mrf.mxu0
      %v971 = vadd.f32 0.0, %v970
      %v972 = vpop.f32.mrf.mxu0
      %v973 = vpop.f32.mrf.mxu0
      %v974 = vadd.f32 0.0, %v973
      %v975 = vpop.f32.mrf.mxu0
      %976 = vmatprep.mubr.bf16.mxu0 0
      %977 = vmatmul.mubr.bf16.gmra.mxu0 %v911
      %v978 = vpop.f32.mrf.mxu0
      %v979 = vadd.f32 0.0, %v978
      %v980 = vpop.f32.mrf.mxu0
      %v981 = vpop.f32.mrf.mxu0
      %v982 = vadd.f32 0.0, %v981
      %v983 = vpop.f32.mrf.mxu0
      %984 = vmatprep.mubr.bf16.mxu0 0
      %985 = vmatmul.mubr.bf16.gmra.mxu0 %v914
      %v986 = vpop.f32.mrf.mxu0
      %v987 = vadd.f32 0.0, %v986
      %v988 = vpop.f32.mrf.mxu0
      %v989 = vpop.f32.mrf.mxu0
      %v990 = vadd.f32 0.0, %v989
      %v991 = vpop.f32.mrf.mxu0
      %992 = vmatprep.mubr.bf16.mxu0 0
      %993 = vmatmul.mubr.bf16.gmra.mxu0 %v917
      %v994 = vpop.f32.mrf.mxu0
      %v995 = vadd.f32 0.0, %v994
      %v996 = vpop.f32.mrf.mxu0
      %v997 = vpop.f32.mrf.mxu0
      %v998 = vadd.f32 0.0, %v997
      %v999 = vpop.f32.mrf.mxu0
      %1000 = vmatprep.mubr.bf16.mxu0 0
      %1001 = vmatmul.mubr.bf16.gmra.mxu0 %v920
      %v1002 = vpop.f32.mrf.mxu0
      %v1003 = vadd.f32 0.0, %v1002
      %v1004 = vpop.f32.mrf.mxu0
      %v1005 = vpop.f32.mrf.mxu0
      %v1006 = vadd.f32 0.0, %v1005
      %v1007 = vpop.f32.mrf.mxu0
      %1008 = vmatprep.mubr.bf16.mxu0 0
      %1009 = vmatmul.mubr.bf16.gmra.mxu0 %v923
      %v1010 = vpop.f32.mrf.mxu0
      %v1011 = vadd.f32 0.0, %v1010
      %v1012 = vpop.f32.mrf.mxu0
      %v1013 = vpop.f32.mrf.mxu0
      %v1014 = vadd.f32 0.0, %v1013
      %v1015 = vpop.f32.mrf.mxu0
      %1016 = vmatprep.mubr.bf16.mxu0 0
      %1017 = vmatmul.mubr.bf16.gmra.mxu0 %v926
      %v1018 = vpop.f32.mrf.mxu0
      %v1019 = vadd.f32 0.0, %v1018
      %v1020 = vpop.f32.mrf.mxu0
      %v1021 = vpop.f32.mrf.mxu0
      %v1022 = vadd.f32 0.0, %v1021
      %v1023 = vpop.f32.mrf.mxu0
      %1024 = vdwg.mxu0
      %v1025 = vpack.c.bf16 %v966, %v963
      %v1026 = vpack.c.bf16 %v974, %v971
      %v1027 = vpack.c.bf16 %v982, %v979
      %v1028 = vpack.c.bf16 %v990, %v987
      %v1029 = vpack.c.bf16 %v998, %v995
      %v1030 = vpack.c.bf16 %v1006, %v1003
      %v1031 = vpack.c.bf16 %v1014, %v1011
      %v1032 = vpack.c.bf16 %v1022, %v1019
      %v1033 = vld [vmem:[%s4] sm:$0x3]
      %v1034 = vld [vmem:[%s6] sm:$0x1]
      %v1036 = vlaneseq
      %v1037 = vshrl.u32 %v1036, 7
      %v1038 = vsub.s32 0, %v1037
      %v1039 = vrot.slane %v1034, %v1038
      %v1042 = vsel %vm553, %v1025, 0
      %v1045 = vsel %vm553, %v1026, 0
      %v1048 = vsel %vm553, %v1027, 0
      %v1051 = vsel %vm553, %v1028, 0
      %v1054 = vsel %vm553, %v1029, 0
      %v1057 = vsel %vm553, %v1030, 0
      %v1060 = vsel %vm553, %v1031, 0
      %v1063 = vsel %vm553, %v1032, 0
      %vm1065 = vcmask 1041408
      %v1067 = vsel %vm1065, %v1033, 0
      %1069 = vmatprep.subr.bf16.mxu0 0
      %1070 = vmatpush1.bf16.msra.mxu0 0
      %1071 = vmatprep.subr.bf16.mxu0 0
      %1072 = vmatpush1.bf16.msra.mxu0 0
      %1073 = vmatprep.subr.bf16.mxu0 0
      %1074 = vmatpush1.bf16.msra.mxu0 0
      %1075 = vmatprep.subr.bf16.mxu0 0
      %1076 = vmatpush1.bf16.msra.mxu0 0
      %1077 = vmatprep.subr.bf16.mxu0 0
      %1078 = vmatpush1.bf16.msra.mxu0 0
      %1079 = vmatprep.subr.bf16.mxu0 0
      %1080 = vmatpush1.bf16.msra.mxu0 0
      %1081 = vmatprep.subr.bf16.mxu0 0
      %1082 = vmatpush1.bf16.msra.mxu0 0
      %1083 = vmatprep.subr.bf16.mxu0 0
      %1084 = vmatpush1.bf16.msra.mxu0 %v1067
      %1085 = vmatprep.subr.bf16.mxu0 0
      %1086 = vmatpush2.bf16.msra.mxu0 0
      %1087 = vmatprep.subr.bf16.mxu0 0
      %1088 = vmatpush2.bf16.msra.mxu0 0
      %1089 = vmatprep.subr.bf16.mxu0 0
      %1090 = vmatpush2.bf16.msra.mxu0 0
      %1091 = vmatprep.subr.bf16.mxu0 0
      %1092 = vmatpush2.bf16.msra.mxu0 0
      %1093 = vmatprep.subr.bf16.mxu0 0
      %1094 = vmatpush2.bf16.msra.mxu0 0
      %1095 = vmatprep.subr.bf16.mxu0 0
      %1096 = vmatpush2.bf16.msra.mxu0 0
      %1097 = vmatprep.subr.bf16.mxu0 0
      %1098 = vmatpush2.bf16.msra.mxu0 0
      %1099 = vmatprep.subr.bf16.mxu0 0
      %1100 = vmatpush2.bf16.msra.mxu0 0
      %1101 = vmatprep.mubr.bf16.mxu0 0
      %1102 = vmatmul.mubr.bf16.gmra.mxu0 %v1042
      %v1103 = vpop.f32.mrf.mxu0
      %v1104 = vadd.f32 %v1039, %v1103
      %v1105 = vpop.f32.mrf.mxu0
      %v1106 = vpop.f32.mrf.mxu0
      %v1107 = vadd.f32 %v1039, %v1106
      %v1108 = vpop.f32.mrf.mxu0
      %1109 = vmatprep.mubr.bf16.mxu0 0
      %1110 = vmatmul.mubr.bf16.gmra.mxu0 %v1045
      %v1111 = vpop.f32.mrf.mxu0
      %v1112 = vadd.f32 %v1039, %v1111
      %v1113 = vpop.f32.mrf.mxu0
      %v1114 = vpop.f32.mrf.mxu0
      %v1115 = vadd.f32 %v1039, %v1114
      %v1116 = vpop.f32.mrf.mxu0
      %1117 = vmatprep.mubr.bf16.mxu0 0
      %1118 = vmatmul.mubr.bf16.gmra.mxu0 %v1048
      %v1119 = vpop.f32.mrf.mxu0
      %v1120 = vadd.f32 %v1039, %v1119
      %v1121 = vpop.f32.mrf.mxu0
      %v1122 = vpop.f32.mrf.mxu0
      %v1123 = vadd.f32 %v1039, %v1122
      %v1124 = vpop.f32.mrf.mxu0
      %1125 = vmatprep.mubr.bf16.mxu0 0
      %1126 = vmatmul.mubr.bf16.gmra.mxu0 %v1051
      %v1127 = vpop.f32.mrf.mxu0
      %v1128 = vadd.f32 %v1039, %v1127
      %v1129 = vpop.f32.mrf.mxu0
      %v1130 = vpop.f32.mrf.mxu0
      %v1131 = vadd.f32 %v1039, %v1130
      %v1132 = vpop.f32.mrf.mxu0
      %1133 = vmatprep.mubr.bf16.mxu0 0
      %1134 = vmatmul.mubr.bf16.gmra.mxu0 %v1054
      %v1135 = vpop.f32.mrf.mxu0
      %v1136 = vadd.f32 %v1039, %v1135
      %v1137 = vpop.f32.mrf.mxu0
      %v1138 = vpop.f32.mrf.mxu0
      %v1139 = vadd.f32 %v1039, %v1138
      %v1140 = vpop.f32.mrf.mxu0
      %1141 = vmatprep.mubr.bf16.mxu0 0
      %1142 = vmatmul.mubr.bf16.gmra.mxu0 %v1057
      %v1143 = vpop.f32.mrf.mxu0
      %v1144 = vadd.f32 %v1039, %v1143
      %v1145 = vpop.f32.mrf.mxu0
      %v1146 = vpop.f32.mrf.mxu0
      %v1147 = vadd.f32 %v1039, %v1146
      %v1148 = vpop.f32.mrf.mxu0
      %1149 = vmatprep.mubr.bf16.mxu0 0
      %1150 = vmatmul.mubr.bf16.gmra.mxu0 %v1060
      %v1151 = vpop.f32.mrf.mxu0
      %v1152 = vadd.f32 %v1039, %v1151
      %v1153 = vpop.f32.mrf.mxu0
      %v1154 = vpop.f32.mrf.mxu0
      %v1155 = vadd.f32 %v1039, %v1154
      %v1156 = vpop.f32.mrf.mxu0
      %1157 = vmatprep.mubr.bf16.mxu0 0
      %1158 = vmatmul.mubr.bf16.gmra.mxu0 %v1063
      %v1159 = vpop.f32.mrf.mxu0
      %v1160 = vadd.f32 %v1039, %v1159
      %v1161 = vpop.f32.mrf.mxu0
      %v1162 = vpop.f32.mrf.mxu0
      %v1163 = vadd.f32 %v1039, %v1162
      %v1164 = vpop.f32.mrf.mxu0
      %1165 = vdwg.mxu0
      %v1166 = vadd.f32 %v1104, %v359
      %v1167 = vadd.f32 %v1107, %v360
      %v1168 = vadd.f32 %v1112, %v361
      %v1169 = vadd.f32 %v1115, %v362
      %v1170 = vadd.f32 %v1120, %v363
      %v1171 = vadd.f32 %v1123, %v364
      %v1172 = vadd.f32 %v1128, %v365
      %v1173 = vadd.f32 %v1131, %v366
      %v1174 = vadd.f32 %v1136, %v367
      %v1175 = vadd.f32 %v1139, %v368
      %v1176 = vadd.f32 %v1144, %v369
      %v1177 = vadd.f32 %v1147, %v370
      %v1178 = vadd.f32 %v1152, %v371
      %v1179 = vadd.f32 %v1155, %v372
      %v1180 = vadd.f32 %v1160, %v373
      %v1181 = vadd.f32 %v1163, %v374
      %1182 = vst.msk [vmem:[%s356] sm:$0xff] %vm391, %v1166
      %1183 = vst.msk [vmem:[%s356 + $0x8] sm:$0xff] %vm391, %v1167
      %1184 = vst.msk [vmem:[%s356 + $0x10] sm:$0xff] %vm391, %v1168
      %1185 = vst.msk [vmem:[%s356 + $0x18] sm:$0xff] %vm391, %v1169
      %1186 = vst.msk [vmem:[%s356 + $0x20] sm:$0xff] %vm391, %v1170
      %1187 = vst.msk [vmem:[%s356 + $0x28] sm:$0xff] %vm391, %v1171
      %1188 = vst.msk [vmem:[%s356 + $0x30] sm:$0xff] %vm391, %v1172
      %1189 = vst.msk [vmem:[%s356 + $0x38] sm:$0xff] %vm391, %v1173
      %1190 = vst.msk [vmem:[%s356 + $0x40] sm:$0xff] %vm391, %v1174
      %1191 = vst.msk [vmem:[%s356 + $0x48] sm:$0xff] %vm391, %v1175
      %1192 = vst.msk [vmem:[%s356 + $0x50] sm:$0xff] %vm391, %v1176
      %1193 = vst.msk [vmem:[%s356 + $0x58] sm:$0xff] %vm391, %v1177
      %1194 = vst.msk [vmem:[%s356 + $0x60] sm:$0xff] %vm391, %v1178
      %1195 = vst.msk [vmem:[%s356 + $0x68] sm:$0xff] %vm391, %v1179
      %1196 = vst.msk [vmem:[%s356 + $0x70] sm:$0xff] %vm391, %v1180
      %1197 = vst.msk [vmem:[%s356 + $0x78] sm:$0xff] %vm391, %v1181
      %s1198 = smul.u32 16, %s23
      %p1199 = scmp.lt.s32.totalorder %s22, 1
      %s1200 = scalar_select %p1199, %s22, 1
      %p1201 = scmp.lt.s32.totalorder %s1198, 31
      %s1202 = scalar_select %p1201, %s1198, 31
      %s1203 = smul.addr %s1200, 32
      %s1204 = sadd.s32 %s1202, %s1203
      %s1205 = smul.addr %s1204, 8
      %s1206 = scalar_lea.vmem %s7, %s1205
      // Predicated region
      $region49: #{space_nonlocal.1} parent=47 // pred_check
        %p1207 = pneg %p214
      $region50: #{space_nonlocal.1} parent=47 // pred_check_branch
        %1209 = sbr.rel (%p1207) target = $region52
      $region51: #{space_nonlocal.1} parent=47 // pred_region
        %s1210 = smul.u32 16, %s23
      $region52: #{space_nonlocal.1} parent=47 // pred_fallthru
        _
    $region48: #{space_nonlocal.1} parent=5 // pred_fallthru
      _
    %p1211 = scmp.le.s32.totalorder 2, %s13
    // Predicated region
    $region53: #{space_nonlocal.1} parent=5 // pred_check
      %p1212 = pneg %p1211
    $region54: #{space_nonlocal.1} parent=5 // pred_check_branch
      %1214 = sbr.rel (%p1212) target = $region56
    $region55: #{space_nonlocal.1} parent=5 // pred_region
      %s1215 = ssub.s32 %s13, 2
      // Predicated region
      $region57: #{space_nonlocal.1} parent=55 // pred_check
        %p1216 = pneg %p220
      $region58: #{space_nonlocal.1} parent=55 // pred_check_branch
        %1218 = sbr.rel (%p1216) target = $region60
      $region59: #{space_nonlocal.1} parent=55 // pred_region
        %s1219 = smul.u32 16, %s25
        %p1220 = scmp.lt.s32.totalorder %s24, 1
        %s1221 = scalar_select %p1220, %s24, 1
        %p1222 = scmp.lt.s32.totalorder %s1219, 31
        %s1223 = scalar_select %p1222, %s1219, 31
        %s1224 = smul.addr %s1221, 32
        %s1225 = sadd.s32 %s1223, %s1224
        %s1226 = smul.addr %s1225, 8
        %s1227 = scalar_lea.vmem %s7, %s1226
      $region60: #{space_nonlocal.1} parent=55 // pred_fallthru
        _
    $region56: #{space_nonlocal.1} parent=5 // pred_fallthru
      _
  $region6: #{space_nonlocal.1} parent=0 // loop_footer
    %s17 = sadd.s32 1, %s13
  $region7: #{space_nonlocal.1} parent=0 // loop_footer_branch
    %12 = sbr.rel target = $region3
  $region8: #{space_nonlocal.1} parent=0 // loop_exit
    _

// kernel: space_nonlocal.1
$region0: #{space_nonlocal.1}
  #allocation0 [shape = 'u32[]', space=smem, size = 0x4, offset = 0x4, fixed_abs, tag = 'smem constant byte address 0x4 - core index']
  #allocation1 [shape = 'u32[144,128]{1,0:T(1,128)}', space=vmem, size = 0x12000, scoped, tag = 'internal scratch']
  %s0 = inlined_call_operand.vmem [shape: f32[2,256,8], index: 0, kind: input, shape index: {}]
  %s1 = inlined_call_operand.vmem [shape: bf16[2,64,4], index: 1, kind: input, shape index: {}]
  %s2 = inlined_call_operand.vmem [shape: bf16[2,64,4], index: 2, kind: input, shape index: {}]
  %s3 = inlined_call_operand.vmem [shape: bf16[8,4], index: 3, kind: input, shape index: {}]
  %s4 = inlined_call_operand.vmem [shape: bf16[4,8], index: 4, kind: input, shape index: {}]
  %s5 = inlined_call_operand.vmem [shape: f32[1,4], index: 5, kind: input, shape index: {}]
  %s6 = inlined_call_operand.vmem [shape: f32[1,8], index: 6, kind: input, shape index: {}]
  %s7 = inlined_call_operand.vmem [shape: f32[2,256,8], index: 7, kind: output, shape index: {}]
  %s8 = sld [smem:[#allocation0]]
  $region61: #{space_nonlocal.1} parent=0
    _
  %s10 = ssub.s32 1, %s8
  %s11 = scalar_select 0, %s10, %s8
  loop: start=0, step=1, limit=6
  $region2: #{space_nonlocal.1} parent=0 // loop_pre_header
    _
  $region3: #{space_nonlocal.1} parent=0 // loop_header
    %s13 = sphi 0, %s17
    %p14 = scmp.ge.s32.totalorder %s13, 6
    %s20 = sphi 0, %s32
    %s21 = sphi 0, %s28
    %s22 = sphi 0, %s20
    %s23 = sphi 0, %s21
    %s24 = sphi 0, %s22
    %s25 = sphi 0, %s23
    %s37 = sphi 0, %s39
    %s40 = sphi 0, %s37
    %s41 = sphi 0, %s40
    %s57 = sphi 0, %s41
    %s63 = sphi 0, %s65
    %s66 = sphi 0, %s63
    %s67 = sphi 0, %s66
    %s83 = sphi 0, %s67
    %s89 = sphi 0, %s91
    %s92 = sphi 0, %s89
    %s93 = sphi 0, %s92
    %s109 = sphi 0, %s93
    %s113 = sphi 0, %s113
    %s115 = sphi 0, %s113
    %s116 = sphi 0, %s115
    %s130 = sphi 0, %s116
    %s134 = sphi 0, %s134
    %s136 = sphi 0, %s134
    %s137 = sphi 0, %s136
    %s151 = sphi 0, %s137
    %s155 = sphi 0, %s155
    %s157 = sphi 0, %s155
    %s158 = sphi 0, %s157
    %s172 = sphi 0, %s158
    %s176 = sphi 0, %s176
    %s178 = sphi 0, %s176
    %s179 = sphi 0, %s178
    %s193 = sphi 0, %s179
    %s201 = sphi 0, %s203
    %s204 = sphi 0, %s201
    %s205 = sphi 0, %s204
    %s221 = sphi 0, %s205
  $region4: #{space_nonlocal.1} parent=0 // loop_header_branch
    %16 = sbr.rel (%p14) target = $region8
  $region5: #{space_nonlocal.1} parent=0 // loop_body
    %s18 = ssub.s32 %s13, 1
    %s19 = ssub.s32 %s13, 2
    %s26 = sadd.s32 1, %s21
    %p27 = scmp.ge.s32.totalorder %s26, 2
    %s28 = scalar_select %p27, 0, %s26
    %s29 = sadd.s32 1, %s20
    %s30 = scalar_select %p27, %s29, %s20
    %p31 = scmp.ge.s32.totalorder %s30, 2
    %s32 = scalar_select %p31, 0, %s30
    %s33 = ssub.s32 %s20, %s32
    %s34 = ssub.s32 %s21, %s28
    %s35 = sor.u32 %s33, %s34
    %p36 = scmp.eq.s32.totalorder %s35, 0
    %s38 = sadd.s32 %s37, 1
    %s39 = scalar_select %p36, %s37, %s38
    %p42 = pneg %p36
    %p43 = scmp.eq.s32.totalorder %s13, 3
    %p44 = por %p42, %p43
    %p45 = scmp.ne.s32.totalorder %s37, %s40
    %p46 = scmp.eq.s32.totalorder %s13, 0
    %p47 = por %p45, %p46
    %p48 = scmp.ne.s32.totalorder %s37, %s40
    %p49 = scmp.eq.s32.totalorder %s18, 3
    %p50 = por %p48, %p49
    %p51 = scmp.ne.s32.totalorder %s40, %s41
    %p52 = scmp.eq.s32.totalorder %s18, 0
    %p53 = por %p51, %p52
    %p54 = scmp.ne.s32.totalorder %s40, %s41
    %p55 = scmp.eq.s32.totalorder %s19, 3
    %p56 = por %p54, %p55
    %p58 = scmp.ne.s32.totalorder %s41, %s57
    %p59 = scmp.eq.s32.totalorder %s19, 0
    %p60 = por %p58, %p59
    %s61 = ssub.s32 %s20, %s32
    %p62 = scmp.eq.s32.totalorder %s61, 0
    %s64 = sadd.s32 %s63, 1
    %s65 = scalar_select %p62, %s63, %s64
    %p68 = pneg %p62
    %p69 = scmp.eq.s32.totalorder %s13, 3
    %p70 = por %p68, %p69
    %p71 = scmp.ne.s32.totalorder %s63, %s66
    %p72 = scmp.eq.s32.totalorder %s13, 0
    %p73 = por %p71, %p72
    %p74 = scmp.ne.s32.totalorder %s63, %s66
    %p75 = scmp.eq.s32.totalorder %s18, 3
    %p76 = por %p74, %p75
    %p77 = scmp.ne.s32.totalorder %s66, %s67
    %p78 = scmp.eq.s32.totalorder %s18, 0
    %p79 = por %p77, %p78
    %p80 = scmp.ne.s32.totalorder %s66, %s67
    %p81 = scmp.eq.s32.totalorder %s19, 3
    %p82 = por %p80, %p81
    %p84 = scmp.ne.s32.totalorder %s67, %s83
    %p85 = scmp.eq.s32.totalorder %s19, 0
    %p86 = por %p84, %p85
    %s87 = ssub.s32 %s20, %s32
    %p88 = scmp.eq.s32.totalorder %s87, 0
    %s90 = sadd.s32 %s89, 1
    %s91 = scalar_select %p88, %s89, %s90
    %p94 = pneg %p88
    %p95 = scmp.eq.s32.totalorder %s13, 3
    %p96 = por %p94, %p95
    %p97 = scmp.ne.s32.totalorder %s89, %s92
    %p98 = scmp.eq.s32.totalorder %s13, 0
    %p99 = por %p97, %p98
    %p100 = scmp.ne.s32.totalorder %s89, %s92
    %p101 = scmp.eq.s32.totalorder %s18, 3
    %p102 = por %p100, %p101
    %p103 = scmp.ne.s32.totalorder %s92, %s93
    %p104 = scmp.eq.s32.totalorder %s18, 0
    %p105 = por %p103, %p104
    %p106 = scmp.ne.s32.totalorder %s92, %s93
    %p107 = scmp.eq.s32.totalorder %s19, 3
    %p108 = por %p106, %p107
    %p110 = scmp.ne.s32.totalorder %s93, %s109
    %p111 = scmp.eq.s32.totalorder %s19, 0
    %p112 = por %p110, %p111
    %s114 = sadd.s32 %s113, 1
    %p117 = scmp.eq.s32.totalorder %s13, 3
    %p118 = scmp.ne.s32.totalorder %s113, %s115
    %p119 = scmp.eq.s32.totalorder %s13, 0
    %p120 = por %p118, %p119
    %p121 = scmp.ne.s32.totalorder %s113, %s115
    %p122 = scmp.eq.s32.totalorder %s18, 3
    %p123 = por %p121, %p122
    %p124 = scmp.ne.s32.totalorder %s115, %s116
    %p125 = scmp.eq.s32.totalorder %s18, 0
    %p126 = por %p124, %p125
    %p127 = scmp.ne.s32.totalorder %s115, %s116
    %p128 = scmp.eq.s32.totalorder %s19, 3
    %p129 = por %p127, %p128
    %p131 = scmp.ne.s32.totalorder %s116, %s130
    %p132 = scmp.eq.s32.totalorder %s19, 0
    %p133 = por %p131, %p132
    %s135 = sadd.s32 %s134, 1
    %p138 = scmp.eq.s32.totalorder %s13, 3
    %p139 = scmp.ne.s32.totalorder %s134, %s136
    %p140 = scmp.eq.s32.totalorder %s13, 0
    %p141 = por %p139, %p140
    %p142 = scmp.ne.s32.totalorder %s134, %s136
    %p143 = scmp.eq.s32.totalorder %s18, 3
    %p144 = por %p142, %p143
    %p145 = scmp.ne.s32.totalorder %s136, %s137
    %p146 = scmp.eq.s32.totalorder %s18, 0
    %p147 = por %p145, %p146
    %p148 = scmp.ne.s32.totalorder %s136, %s137
    %p149 = scmp.eq.s32.totalorder %s19, 3
    %p150 = por %p148, %p149
    %p152 = scmp.ne.s32.totalorder %s137, %s151
    %p153 = scmp.eq.s32.totalorder %s19, 0
    %p154 = por %p152, %p153
    %s156 = sadd.s32 %s155, 1
    %p159 = scmp.eq.s32.totalorder %s13, 3
    %p160 = scmp.ne.s32.totalorder %s155, %s157
    %p161 = scmp.eq.s32.totalorder %s13, 0
    %p162 = por %p160, %p161
    %p163 = scmp.ne.s32.totalorder %s155, %s157
    %p164 = scmp.eq.s32.totalorder %s18, 3
    %p165 = por %p163, %p164
    %p166 = scmp.ne.s32.totalorder %s157, %s158
    %p167 = scmp.eq.s32.totalorder %s18, 0
    %p168 = por %p166, %p167
    %p169 = scmp.ne.s32.totalorder %s157, %s158
    %p170 = scmp.eq.s32.totalorder %s19, 3
    %p171 = por %p169, %p170
    %p173 = scmp.ne.s32.totalorder %s158, %s172
    %p174 = scmp.eq.s32.totalorder %s19, 0
    %p175 = por %p173, %p174
    %s177 = sadd.s32 %s176, 1
    %p180 = scmp.eq.s32.totalorder %s13, 3
    %p181 = scmp.ne.s32.totalorder %s176, %s178
    %p182 = scmp.eq.s32.totalorder %s13, 0
    %p183 = por %p181, %p182
    %p184 = scmp.ne.s32.totalorder %s176, %s178
    %p185 = scmp.eq.s32.totalorder %s18, 3
    %p186 = por %p184, %p185
    %p187 = scmp.ne.s32.totalorder %s178, %s179
    %p188 = scmp.eq.s32.totalorder %s18, 0
    %p189 = por %p187, %p188
    %p190 = scmp.ne.s32.totalorder %s178, %s179
    %p191 = scmp.eq.s32.totalorder %s19, 3
    %p192 = por %p190, %p191
    %p194 = scmp.ne.s32.totalorder %s179, %s193
    %p195 = scmp.eq.s32.totalorder %s19, 0
    %p196 = por %p194, %p195
    %s197 = ssub.s32 %s20, %s32
    %s198 = ssub.s32 %s21, %s28
    %s199 = sor.u32 %s197, %s198
    %p200 = scmp.eq.s32.totalorder %s199, 0
    %s202 = sadd.s32 %s201, 1
    %s203 = scalar_select %p200, %s201, %s202
    %p206 = pneg %p200
    %p207 = scmp.eq.s32.totalorder %s13, 3
    %p208 = por %p206, %p207
    %p209 = scmp.ne.s32.totalorder %s201, %s204
    %p210 = scmp.eq.s32.totalorder %s13, 0
    %p211 = por %p209, %p210
    %p212 = scmp.ne.s32.totalorder %s201, %s204
    %p213 = scmp.eq.s32.totalorder %s18, 3
    %p214 = por %p212, %p213
    %p215 = scmp.ne.s32.totalorder %s204, %s205
    %p216 = scmp.eq.s32.totalorder %s18, 0
    %p217 = por %p215, %p216
    %p218 = scmp.ne.s32.totalorder %s204, %s205
    %p219 = scmp.eq.s32.totalorder %s19, 3
    %p220 = por %p218, %p219
    %p222 = scmp.ne.s32.totalorder %s205, %s221
    %p223 = scmp.eq.s32.totalorder %s19, 0
    %p224 = por %p222, %p223
    %p225 = scmp.le.s32.totalorder 1, %s13
    %p226 = scmp.lt.s32.totalorder %s13, 5
    %p227 = pnand %p225, %p226
    %p228 = pneg %p227
    // Predicated region
    $region9: #{space_nonlocal.1} parent=5 // pred_check
      _
    $region10: #{space_nonlocal.1} parent=5 // pred_check_branch
      %230 = sbr.rel (%p227) target = $region12
    $region11: #{space_nonlocal.1} parent=5 // pred_region
      %s231 = ssub.s32 %s13, 1
      // Predicated region
      $region13: #{space_nonlocal.1} parent=11 // pred_check
        %p232 = pneg %p126
      $region14: #{space_nonlocal.1} parent=11 // pred_check_branch
        %234 = sbr.rel (%p232) target = $region16
      $region15: #{space_nonlocal.1} parent=11 // pred_region
        _
      $region16: #{space_nonlocal.1} parent=11 // pred_fallthru
        _
      // Predicated region
      $region17: #{space_nonlocal.1} parent=11 // pred_check
        %p235 = pneg %p147
      $region18: #{space_nonlocal.1} parent=11 // pred_check_branch
        %237 = sbr.rel (%p235) target = $region20
      $region19: #{space_nonlocal.1} parent=11 // pred_region
        _
      $region20: #{space_nonlocal.1} parent=11 // pred_fallthru
        _
      // Predicated region
      $region21: #{space_nonlocal.1} parent=11 // pred_check
        %p238 = pneg %p168
      $region22: #{space_nonlocal.1} parent=11 // pred_check_branch
        %240 = sbr.rel (%p238) target = $region24
      $region23: #{space_nonlocal.1} parent=11 // pred_region
        _
      $region24: #{space_nonlocal.1} parent=11 // pred_fallthru
        _
      // Predicated region
      $region25: #{space_nonlocal.1} parent=11 // pred_check
        %p241 = pneg %p189
      $region26: #{space_nonlocal.1} parent=11 // pred_check_branch
        %243 = sbr.rel (%p241) target = $region28
      $region27: #{space_nonlocal.1} parent=11 // pred_region
        _
      $region28: #{space_nonlocal.1} parent=11 // pred_fallthru
        _
    $region12: #{space_nonlocal.1} parent=5 // pred_fallthru
      _
    %p244 = scmp.lt.s32.totalorder %s13, 4
    // Predicated region
    $region29: #{space_nonlocal.1} parent=5 // pred_check
      %p245 = pneg %p244
    $region30: #{space_nonlocal.1} parent=5 // pred_check_branch
      %247 = sbr.rel (%p245) target = $region32
    $region31: #{space_nonlocal.1} parent=5 // pred_region
      // Predicated region
      $region33: #{space_nonlocal.1} parent=31 // pred_check
        %p248 = pneg %p47
      $region34: #{space_nonlocal.1} parent=31 // pred_check_branch
        %250 = sbr.rel (%p248) target = $region36
      $region35: #{space_nonlocal.1} parent=31 // pred_region
        %s251 = smul.u32 16, %s21
        %p252 = scmp.lt.s32.totalorder %s20, 1
        %s253 = scalar_select %p252, %s20, 1
        %p254 = scmp.lt.s32.totalorder %s251, 31
        %s255 = scalar_select %p254, %s251, 31
        %s256 = smul.addr %s253, 32
        %s257 = sadd.s32 %s255, %s256
        %s258 = smul.addr %s257, 8
        %s259 = scalar_lea.vmem %s0, %s258
        %s260 = smul.u32 16, %s21
      $region36: #{space_nonlocal.1} parent=31 // pred_fallthru
        _
      // Predicated region
      $region37: #{space_nonlocal.1} parent=31 // pred_check
        %p261 = pneg %p73
      $region38: #{space_nonlocal.1} parent=31 // pred_check_branch
        %263 = sbr.rel (%p261) target = $region40
      $region39: #{space_nonlocal.1} parent=31 // pred_region
        %p264 = scmp.lt.s32.totalorder %s20, 1
        %s265 = scalar_select %p264, %s20, 1
        %s266 = smul.addr %s265, 8
        %s267 = smul.addr %s266, 4
        %s268 = scalar_lea.vmem %s1, %s267
      $region40: #{space_nonlocal.1} parent=31 // pred_fallthru
        _
      // Predicated region
      $region41: #{space_nonlocal.1} parent=31 // pred_check
        %p269 = pneg %p99
      $region42: #{space_nonlocal.1} parent=31 // pred_check_branch
        %271 = sbr.rel (%p269) target = $region44
      $region43: #{space_nonlocal.1} parent=31 // pred_region
        %p272 = scmp.lt.s32.totalorder %s20, 1
        %s273 = scalar_select %p272, %s20, 1
        %s274 = smul.addr %s273, 8
        %s275 = smul.addr %s274, 4
        %s276 = scalar_lea.vmem %s2, %s275
      $region44: #{space_nonlocal.1} parent=31 // pred_fallthru
        _
    $region32: #{space_nonlocal.1} parent=5 // pred_fallthru
      _
    %p277 = scmp.le.s32.totalorder 1, %s13
    %p278 = scmp.lt.s32.totalorder %s13, 5
    %p279 = pnand %p277, %p278
    %p280 = pneg %p279
    // Predicated region
    $region45: #{space_nonlocal.1} parent=5 // pred_check
      _
    $region46: #{space_nonlocal.1} parent=5 // pred_check_branch
      %282 = sbr.rel (%p279) target = $region48
    $region47: #{space_nonlocal.1} parent=5 // pred_region
      %s283 = ssub.s32 %s13, 1
      %s284 = smul.u32 16, %s23
      %p285 = scmp.lt.s32.totalorder %s22, 1
      %s286 = scalar_select %p285, %s22, 1
      %p287 = scmp.lt.s32.totalorder %s284, 31
      %s288 = scalar_select %p287, %s284, 31
      %s289 = smul.addr %s286, 32
      %s290 = sadd.s32 %s288, %s289
      %s291 = smul.addr %s290, 8
      %s292 = scalar_lea.vmem %s0, %s291
      %p293 = pneg %p53
      %p294 = pneg %p50
      %p295 = scmp.lt.s32.totalorder %s22, 1
      %s296 = scalar_select %p295, %s22, 1
      %s297 = smul.addr %s296, 8
      %s298 = smul.addr %s297, 4
      %s299 = scalar_lea.vmem %s1, %s298
      %p300 = pneg %p79
      %p301 = pneg %p76
      %p302 = scmp.lt.s32.totalorder %s22, 1
      %s303 = scalar_select %p302, %s22, 1
      %s304 = smul.addr %s303, 8
      %s305 = smul.addr %s304, 4
      %s306 = scalar_lea.vmem %s2, %s305
      %p307 = pneg %p105
      %p308 = pneg %p102
      %p309 = pneg %p126
      %p310 = pneg %p123
      %p311 = pneg %p147
      %p312 = pneg %p144
      %p313 = pneg %p168
      %p314 = pneg %p165
      %p315 = pneg %p189
      %p316 = pneg %p186
      %p317 = pneg %p217
      %p318 = pneg %p214
      %s319 = smul.u32 16, %s23
      %p320 = scmp.lt.s32.totalorder %s22, 1
      %s321 = scalar_select %p320, %s22, 1
      %p322 = scmp.lt.s32.totalorder %s319, 31
      %s323 = scalar_select %p322, %s319, 31
      %s324 = smul.addr %s321, 32
      %s325 = sadd.s32 %s323, %s324
      %s326 = smul.addr %s325, 8
      %s327 = scalar_lea.vmem %s7, %s326
      %s328 = smul.u32 16, %s23
      %p329 = scmp.lt.s32.totalorder %s22, 1
      %s330 = scalar_select %p329, %s22, 1
      %p331 = scmp.lt.s32.totalorder %s328, 31
      %s332 = scalar_select %p331, %s328, 31
      %s333 = smul.addr %s330, 32
      %s334 = sadd.s32 %s332, %s333
      %s335 = smul.addr %s334, 8
      %s336 = scalar_lea.vmem %s0, %s335
      %s337 = smul.u32 16, %s23
      %p338 = scmp.lt.s32.totalorder %s22, 1
      %s339 = scalar_select %p338, %s22, 1
      %s340 = smul.addr %s339, 8
      %s341 = smul.addr %s340, 4
      %s342 = scalar_lea.vmem %s1, %s341
      %p343 = scmp.lt.s32.totalorder %s22, 1
      %s344 = scalar_select %p343, %s22, 1
      %s345 = smul.addr %s344, 8
      %s346 = smul.addr %s345, 4
      %s347 = scalar_lea.vmem %s2, %s346
      %s348 = smul.u32 16, %s23
      %p349 = scmp.lt.s32.totalorder %s22, 1
      %s350 = scalar_select %p349, %s22, 1
      %p351 = scmp.lt.s32.totalorder %s348, 31
      %s352 = scalar_select %p351, %s348, 31
      %s353 = smul.addr %s350, 32
      %s354 = sadd.s32 %s352, %s353
      %s355 = smul.addr %s354, 8
      %s356 = scalar_lea.vmem %s7, %s355
      %s357 = smul.u32 16, %s23
      %v359 = vld [vmem:[%s336] sm:$0xff]
      %v360 = vld [vmem:[%s336 + $0x8] sm:$0xff]
      %v361 = vld [vmem:[%s336 + $0x10] sm:$0xff]
      %v362 = vld [vmem:[%s336 + $0x18] sm:$0xff]
      %v363 = vld [vmem:[%s336 + $0x20] sm:$0xff]
      %v364 = vld [vmem:[%s336 + $0x28] sm:$0xff]
      %v365 = vld [vmem:[%s336 + $0x30] sm:$0xff]
      %v366 = vld [vmem:[%s336 + $0x38] sm:$0xff]
      %v367 = vld [vmem:[%s336 + $0x40] sm:$0xff]
      %v368 = vld [vmem:[%s336 + $0x48] sm:$0xff]
      %v369 = vld [vmem:[%s336 + $0x50] sm:$0xff]
      %v370 = vld [vmem:[%s336 + $0x58] sm:$0xff]
      %v371 = vld [vmem:[%s336 + $0x60] sm:$0xff]
      %v372 = vld [vmem:[%s336 + $0x68] sm:$0xff]
      %v373 = vld [vmem:[%s336 + $0x70] sm:$0xff]
      %v374 = vld [vmem:[%s336 + $0x78] sm:$0xff]
      %v375 = vpack.c.bf16 %v360, %v359
      %v376 = vpack.c.bf16 %v362, %v361
      %v377 = vpack.c.bf16 %v364, %v363
      %v378 = vpack.c.bf16 %v366, %v365
      %v379 = vpack.c.bf16 %v368, %v367
      %v380 = vpack.c.bf16 %v370, %v369
      %v381 = vpack.c.bf16 %v372, %v371
      %v382 = vpack.c.bf16 %v374, %v373
      %v383 = vld [vmem:[%s3] sm:$0xf]
      %v384 = vld [vmem:[%s5] sm:$0x1]
      %v386 = vlaneseq
      %v387 = vshrl.u32 %v386, 7
      %v388 = vsub.s32 0, %v387
      %v389 = vrot.slane %v384, %v388
      %vm391 = vcmask 64512
      %v393 = vsel %vm391, %v375, 0
      %v396 = vsel %vm391, %v376, 0
      %v399 = vsel %vm391, %v377, 0
      %v402 = vsel %vm391, %v378, 0
      %v405 = vsel %vm391, %v379, 0
      %v408 = vsel %vm391, %v380, 0
      %v411 = vsel %vm391, %v381, 0
      %v414 = vsel %vm391, %v382, 0
      %vm416 = vcmask 1043456
      %v418 = vsel %vm416, %v383, 0
      %420 = vmatprep.subr.bf16.mxu0 0
      %421 = vmatpush1.bf16.msra.mxu0 0
      %422 = vmatprep.subr.bf16.mxu0 0
      %423 = vmatpush1.bf16.msra.mxu0 0
      %424 = vmatprep.subr.bf16.mxu0 0
      %425 = vmatpush1.bf16.msra.mxu0 0
      %426 = vmatprep.subr.bf16.mxu0 0
      %427 = vmatpush1.bf16.msra.mxu0 0
      %428 = vmatprep.subr.bf16.mxu0 0
      %429 = vmatpush1.bf16.msra.mxu0 0
      %430 = vmatprep.subr.bf16.mxu0 0
      %431 = vmatpush1.bf16.msra.mxu0 0
      %432 = vmatprep.subr.bf16.mxu0 0
      %433 = vmatpush1.bf16.msra.mxu0 0
      %434 = vmatprep.subr.bf16.mxu0 0
      %435 = vmatpush1.bf16.msra.mxu0 %v418
      %436 = vmatprep.subr.bf16.mxu0 0
      %437 = vmatpush2.bf16.msra.mxu0 0
      %438 = vmatprep.subr.bf16.mxu0 0
      %439 = vmatpush2.bf16.msra.mxu0 0
      %440 = vmatprep.subr.bf16.mxu0 0
      %441 = vmatpush2.bf16.msra.mxu0 0
      %442 = vmatprep.subr.bf16.mxu0 0
      %443 = vmatpush2.bf16.msra.mxu0 0
      %444 = vmatprep.subr.bf16.mxu0 0
      %445 = vmatpush2.bf16.msra.mxu0 0
      %446 = vmatprep.subr.bf16.mxu0 0
      %447 = vmatpush2.bf16.msra.mxu0 0
      %448 = vmatprep.subr.bf16.mxu0 0
      %449 = vmatpush2.bf16.msra.mxu0 0
      %450 = vmatprep.subr.bf16.mxu0 0
      %451 = vmatpush2.bf16.msra.mxu0 0
      %452 = vmatprep.mubr.bf16.mxu0 0
      %453 = vmatmul.mubr.bf16.gmra.mxu0 %v393
      %v454 = vpop.f32.mrf.mxu0
      %v455 = vadd.f32 %v389, %v454
      %v456 = vpop.f32.mrf.mxu0
      %v457 = vpop.f32.mrf.mxu0
      %v458 = vadd.f32 %v389, %v457
      %v459 = vpop.f32.mrf.mxu0
      %460 = vmatprep.mubr.bf16.mxu0 0
      %461 = vmatmul.mubr.bf16.gmra.mxu0 %v396
      %v462 = vpop.f32.mrf.mxu0
      %v463 = vadd.f32 %v389, %v462
      %v464 = vpop.f32.mrf.mxu0
      %v465 = vpop.f32.mrf.mxu0
      %v466 = vadd.f32 %v389, %v465
      %v467 = vpop.f32.mrf.mxu0
      %468 = vmatprep.mubr.bf16.mxu0 0
      %469 = vmatmul.mubr.bf16.gmra.mxu0 %v399
      %v470 = vpop.f32.mrf.mxu0
      %v471 = vadd.f32 %v389, %v470
      %v472 = vpop.f32.mrf.mxu0
      %v473 = vpop.f32.mrf.mxu0
      %v474 = vadd.f32 %v389, %v473
      %v475 = vpop.f32.mrf.mxu0
      %476 = vmatprep.mubr.bf16.mxu0 0
      %477 = vmatmul.mubr.bf16.gmra.mxu0 %v402
      %v478 = vpop.f32.mrf.mxu0
      %v479 = vadd.f32 %v389, %v478
      %v480 = vpop.f32.mrf.mxu0
      %v481 = vpop.f32.mrf.mxu0
      %v482 = vadd.f32 %v389, %v481
      %v483 = vpop.f32.mrf.mxu0
      %484 = vmatprep.mubr.bf16.mxu0 0
      %485 = vmatmul.mubr.bf16.gmra.mxu0 %v405
      %v486 = vpop.f32.mrf.mxu0
      %v487 = vadd.f32 %v389, %v486
      %v488 = vpop.f32.mrf.mxu0
      %v489 = vpop.f32.mrf.mxu0
      %v490 = vadd.f32 %v389, %v489
      %v491 = vpop.f32.mrf.mxu0
      %492 = vmatprep.mubr.bf16.mxu0 0
      %493 = vmatmul.mubr.bf16.gmra.mxu0 %v408
      %v494 = vpop.f32.mrf.mxu0
      %v495 = vadd.f32 %v389, %v494
      %v496 = vpop.f32.mrf.mxu0
      %v497 = vpop.f32.mrf.mxu0
      %v498 = vadd.f32 %v389, %v497
      %v499 = vpop.f32.mrf.mxu0
      %500 = vmatprep.mubr.bf16.mxu0 0
      %501 = vmatmul.mubr.bf16.gmra.mxu0 %v411
      %v502 = vpop.f32.mrf.mxu0
      %v503 = vadd.f32 %v389, %v502
      %v504 = vpop.f32.mrf.mxu0
      %v505 = vpop.f32.mrf.mxu0
      %v506 = vadd.f32 %v389, %v505
      %v507 = vpop.f32.mrf.mxu0
      %508 = vmatprep.mubr.bf16.mxu0 0
      %509 = vmatmul.mubr.bf16.gmra.mxu0 %v414
      %v510 = vpop.f32.mrf.mxu0
      %v511 = vadd.f32 %v389, %v510
      %v512 = vpop.f32.mrf.mxu0
      %v513 = vpop.f32.mrf.mxu0
      %v514 = vadd.f32 %v389, %v513
      %v515 = vpop.f32.mrf.mxu0
      %516 = vdwg.mxu0
      %v517 = vpack.c.bf16 %v458, %v455
      %v518 = vpack.c.bf16 %v466, %v463
      %v519 = vpack.c.bf16 %v474, %v471
      %v520 = vpack.c.bf16 %v482, %v479
      %v521 = vpack.c.bf16 %v490, %v487
      %v522 = vpack.c.bf16 %v498, %v495
      %v523 = vpack.c.bf16 %v506, %v503
      %v524 = vpack.c.bf16 %v514, %v511
      %v525 = vld [vmem:[%s342] sm:$0xf]
      %v526 = vld [vmem:[%s342 + $0x4] sm:$0xf]
      %v527 = vld [vmem:[%s342 + $0x8] sm:$0xf]
      %v528 = vld [vmem:[%s342 + $0xc] sm:$0xf]
      %v529 = vld [vmem:[%s342 + $0x10] sm:$0xf]
      %v530 = vld [vmem:[%s342 + $0x14] sm:$0xf]
      %v531 = vld [vmem:[%s342 + $0x18] sm:$0xf]
      %v532 = vld [vmem:[%s342 + $0x1c] sm:$0xf]
      %v541 = vunpack.c.l.b16 %v525
      %v542 = vunpack.c.l.b16 %v526
      %v543 = vunpack.c.l.b16 %v527
      %v544 = vunpack.c.l.b16 %v528
      %v545 = vunpack.c.l.b16 %v529
      %v546 = vunpack.c.l.b16 %v530
      %v547 = vunpack.c.l.b16 %v531
      %v548 = vunpack.c.l.b16 %v532
      %v549 = vpack.c.b16 %v542, %v541
      %v550 = vpack.c.b16 %v544, %v543
      %v551 = vpack.c.b16 %v546, %v545
      %v552 = vpack.c.b16 %v548, %v547
      %vm553 = vcmask 31744
      %v555 = vsel %vm553, %v517, 0
      %v558 = vsel %vm553, %v518, 0
      %v561 = vsel %vm553, %v519, 0
      %v564 = vsel %vm553, %v520, 0
      %v567 = vsel %vm553, %v521, 0
      %v570 = vsel %vm553, %v522, 0
      %v573 = vsel %vm553, %v523, 0
      %v576 = vsel %vm553, %v524, 0
      %v579 = vsel %vm553, %v549, 0
      %v582 = vsel %vm553, %v550, 0
      %v585 = vsel %vm553, %v551, 0
      %v588 = vsel %vm553, %v552, 0
      %590 = vmatprep.subr.bf16.mxu0 0
      %591 = vmatpush1.bf16.xpose.msra.mxu0 0
      %592 = vmatprep.subr.bf16.mxu0 0
      %593 = vmatpush1.bf16.xpose.msra.mxu0 0
      %594 = vmatprep.subr.bf16.mxu0 0
      %595 = vmatpush1.bf16.xpose.msra.mxu0 0
      %596 = vmatprep.subr.bf16.mxu0 0
      %597 = vmatpush1.bf16.xpose.msra.mxu0 0
      %598 = vmatprep.subr.bf16.mxu0 0
      %599 = vmatpush1.bf16.xpose.msra.mxu0 %v588
      %600 = vmatprep.subr.bf16.mxu0 0
      %601 = vmatpush1.bf16.xpose.msra.mxu0 %v585
      %602 = vmatprep.subr.bf16.mxu0 0
      %603 = vmatpush1.bf16.xpose.msra.mxu0 %v582
      %604 = vmatprep.subr.bf16.mxu0 0
      %605 = vmatpush1.bf16.xpose.msra.mxu0 %v579
      %606 = vmatprep.subr.bf16.mxu0 0
      %607 = vmatpush2.bf16.xpose.msra.mxu0 0
      %608 = vmatprep.subr.bf16.mxu0 0
      %609 = vmatpush2.bf16.xpose.msra.mxu0 0
      %610 = vmatprep.subr.bf16.mxu0 0
      %611 = vmatpush2.bf16.xpose.msra.mxu0 0
      %612 = vmatprep.subr.bf16.mxu0 0
      %613 = vmatpush2.bf16.xpose.msra.mxu0 0
      %614 = vmatprep.subr.bf16.mxu0 0
      %615 = vmatpush2.bf16.xpose.msra.mxu0 0
      %616 = vmatprep.subr.bf16.mxu0 0
      %617 = vmatpush2.bf16.xpose.msra.mxu0 0
      %618 = vmatprep.subr.bf16.mxu0 0
      %619 = vmatpush2.bf16.xpose.msra.mxu0 0
      %620 = vmatprep.subr.bf16.mxu0 0
      %621 = vmatpush2.bf16.xpose.msra.mxu0 0
      %622 = vmatprep.mubr.bf16.mxu0 0
      %623 = vmatmul.mubr.bf16.gmra.mxu0 %v555
      %v624 = vpop.f32.mrf.mxu0
      %v625 = vadd.f32 0.0, %v624
      %v626 = vpop.f32.mrf.mxu0
      %v627 = vpop.f32.mrf.mxu0
      %v628 = vadd.f32 0.0, %v627
      %v629 = vpop.f32.mrf.mxu0
      %630 = vmatprep.mubr.bf16.mxu0 0
      %631 = vmatmul.mubr.bf16.gmra.mxu0 %v558
      %v632 = vpop.f32.mrf.mxu0
      %v633 = vadd.f32 0.0, %v632
      %v634 = vpop.f32.mrf.mxu0
      %v635 = vpop.f32.mrf.mxu0
      %v636 = vadd.f32 0.0, %v635
      %v637 = vpop.f32.mrf.mxu0
      %638 = vmatprep.mubr.bf16.mxu0 0
      %639 = vmatmul.mubr.bf16.gmra.mxu0 %v561
      %v640 = vpop.f32.mrf.mxu0
      %v641 = vadd.f32 0.0, %v640
      %v642 = vpop.f32.mrf.mxu0
      %v643 = vpop.f32.mrf.mxu0
      %v644 = vadd.f32 0.0, %v643
      %v645 = vpop.f32.mrf.mxu0
      %646 = vmatprep.mubr.bf16.mxu0 0
      %647 = vmatmul.mubr.bf16.gmra.mxu0 %v564
      %v648 = vpop.f32.mrf.mxu0
      %v649 = vadd.f32 0.0, %v648
      %v650 = vpop.f32.mrf.mxu0
      %v651 = vpop.f32.mrf.mxu0
      %v652 = vadd.f32 0.0, %v651
      %v653 = vpop.f32.mrf.mxu0
      %654 = vmatprep.mubr.bf16.mxu0 0
      %655 = vmatmul.mubr.bf16.gmra.mxu0 %v567
      %v656 = vpop.f32.mrf.mxu0
      %v657 = vadd.f32 0.0, %v656
      %v658 = vpop.f32.mrf.mxu0
      %v659 = vpop.f32.mrf.mxu0
      %v660 = vadd.f32 0.0, %v659
      %v661 = vpop.f32.mrf.mxu0
      %662 = vmatprep.mubr.bf16.mxu0 0
      %663 = vmatmul.mubr.bf16.gmra.mxu0 %v570
      %v664 = vpop.f32.mrf.mxu0
      %v665 = vadd.f32 0.0, %v664
      %v666 = vpop.f32.mrf.mxu0
      %v667 = vpop.f32.mrf.mxu0
      %v668 = vadd.f32 0.0, %v667
      %v669 = vpop.f32.mrf.mxu0
      %670 = vmatprep.mubr.bf16.mxu0 0
      %671 = vmatmul.mubr.bf16.gmra.mxu0 %v573
      %v672 = vpop.f32.mrf.mxu0
      %v673 = vadd.f32 0.0, %v672
      %v674 = vpop.f32.mrf.mxu0
      %v675 = vpop.f32.mrf.mxu0
      %v676 = vadd.f32 0.0, %v675
      %v677 = vpop.f32.mrf.mxu0
      %678 = vmatprep.mubr.bf16.mxu0 0
      %679 = vmatmul.mubr.bf16.gmra.mxu0 %v576
      %v680 = vpop.f32.mrf.mxu0
      %v681 = vadd.f32 0.0, %v680
      %v682 = vpop.f32.mrf.mxu0
      %v683 = vpop.f32.mrf.mxu0
      %v684 = vadd.f32 0.0, %v683
      %v685 = vpop.f32.mrf.mxu0
      %686 = vdwg.mxu0
      %vm687 = vcmask 523264
      %v688 = vsel %vm687, %v625, -inf
      %689 = vmax.xlane.f32.xlu0 %v688
      %v690 = vpop.xlane.xlu0 %689
      %v691 = vsel %vm687, %v628, -inf
      %692 = vmax.xlane.f32.xlu0 %v691
      %v693 = vpop.xlane.xlu0 %692
      %v694 = vsel %vm687, %v633, -inf
      %695 = vmax.xlane.f32.xlu0 %v694
      %v696 = vpop.xlane.xlu0 %695
      %v697 = vsel %vm687, %v636, -inf
      %698 = vmax.xlane.f32.xlu0 %v697
      %v699 = vpop.xlane.xlu0 %698
      %v700 = vsel %vm687, %v641, -inf
      %701 = vmax.xlane.f32.xlu0 %v700
      %v702 = vpop.xlane.xlu0 %701
      %v703 = vsel %vm687, %v644, -inf
      %704 = vmax.xlane.f32.xlu0 %v703
      %v705 = vpop.xlane.xlu0 %704
      %v706 = vsel %vm687, %v649, -inf
      %707 = vmax.xlane.f32.xlu0 %v706
      %v708 = vpop.xlane.xlu0 %707
      %v709 = vsel %vm687, %v652, -inf
      %710 = vmax.xlane.f32.xlu0 %v709
      %v711 = vpop.xlane.xlu0 %710
      %v712 = vsel %vm687, %v657, -inf
      %713 = vmax.xlane.f32.xlu0 %v712
      %v714 = vpop.xlane.xlu0 %713
      %v715 = vsel %vm687, %v660, -inf
      %716 = vmax.xlane.f32.xlu0 %v715
      %v717 = vpop.xlane.xlu0 %716
      %v718 = vsel %vm687, %v665, -inf
      %719 = vmax.xlane.f32.xlu0 %v718
      %v720 = vpop.xlane.xlu0 %719
      %v721 = vsel %vm687, %v668, -inf
      %722 = vmax.xlane.f32.xlu0 %v721
      %v723 = vpop.xlane.xlu0 %722
      %v724 = vsel %vm687, %v673, -inf
      %725 = vmax.xlane.f32.xlu0 %v724
      %v726 = vpop.xlane.xlu0 %725
      %v727 = vsel %vm687, %v676, -inf
      %728 = vmax.xlane.f32.xlu0 %v727
      %v729 = vpop.xlane.xlu0 %728
      %v730 = vsel %vm687, %v681, -inf
      %731 = vmax.xlane.f32.xlu0 %v730
      %v732 = vpop.xlane.xlu0 %731
      %v733 = vsel %vm687, %v684, -inf
      %734 = vmax.xlane.f32.xlu0 %v733
      %v735 = vpop.xlane.xlu0 %734
      %v736 = vsub.f32 %v625, %v690
      %v737 = vsub.f32 %v628, %v693
      %v738 = vsub.f32 %v633, %v696
      %v739 = vsub.f32 %v636, %v699
      %v740 = vsub.f32 %v641, %v702
      %v741 = vsub.f32 %v644, %v705
      %v742 = vsub.f32 %v649, %v708
      %v743 = vsub.f32 %v652, %v711
      %v744 = vsub.f32 %v657, %v714
      %v745 = vsub.f32 %v660, %v717
      %v746 = vsub.f32 %v665, %v720
      %v747 = vsub.f32 %v668, %v723
      %v748 = vsub.f32 %v673, %v726
      %v749 = vsub.f32 %v676, %v729
      %v750 = vsub.f32 %v681, %v732
      %v751 = vsub.f32 %v684, %v735
      %v752 = vmul.f32 %v736, 1.442695
      %v753 = vpow.pop %v752
      %v754 = vmul.f32 %v737, 1.442695
      %v755 = vpow.pop %v754
      %v756 = vmul.f32 %v738, 1.442695
      %v757 = vpow.pop %v756
      %v758 = vmul.f32 %v739, 1.442695
      %v759 = vpow.pop %v758
      %v760 = vmul.f32 %v740, 1.442695
      %v761 = vpow.pop %v760
      %v762 = vmul.f32 %v741, 1.442695
      %v763 = vpow.pop %v762
      %v764 = vmul.f32 %v742, 1.442695
      %v765 = vpow.pop %v764
      %v766 = vmul.f32 %v743, 1.442695
      %v767 = vpow.pop %v766
      %v768 = vmul.f32 %v744, 1.442695
      %v769 = vpow.pop %v768
      %v770 = vmul.f32 %v745, 1.442695
      %v771 = vpow.pop %v770
      %v772 = vmul.f32 %v746, 1.442695
      %v773 = vpow.pop %v772
      %v774 = vmul.f32 %v747, 1.442695
      %v775 = vpow.pop %v774
      %v776 = vmul.f32 %v748, 1.442695
      %v777 = vpow.pop %v776
      %v778 = vmul.f32 %v749, 1.442695
      %v779 = vpow.pop %v778
      %v780 = vmul.f32 %v750, 1.442695
      %v781 = vpow.pop %v780
      %v782 = vmul.f32 %v751, 1.442695
      %v783 = vpow.pop %v782
      %v784 = vsel %vm687, %v753, 0.0
      %785 = vadd.xlane.f32.xlu0 %v784
      %v786 = vpop.xlane.xlu0 %785
      %v787 = vsel %vm687, %v755, 0.0
      %788 = vadd.xlane.f32.xlu0 %v787
      %v789 = vpop.xlane.xlu0 %788
      %v790 = vsel %vm687, %v757, 0.0
      %791 = vadd.xlane.f32.xlu0 %v790
      %v792 = vpop.xlane.xlu0 %791
      %v793 = vsel %vm687, %v759, 0.0
      %794 = vadd.xlane.f32.xlu0 %v793
      %v795 = vpop.xlane.xlu0 %794
      %v796 = vsel %vm687, %v761, 0.0
      %797 = vadd.xlane.f32.xlu0 %v796
      %v798 = vpop.xlane.xlu0 %797
      %v799 = vsel %vm687, %v763, 0.0
      %800 = vadd.xlane.f32.xlu0 %v799
      %v801 = vpop.xlane.xlu0 %800
      %v802 = vsel %vm687, %v765, 0.0
      %803 = vadd.xlane.f32.xlu0 %v802
      %v804 = vpop.xlane.xlu0 %803
      %v805 = vsel %vm687, %v767, 0.0
      %806 = vadd.xlane.f32.xlu0 %v805
      %v807 = vpop.xlane.xlu0 %806
      %v808 = vsel %vm687, %v769, 0.0
      %809 = vadd.xlane.f32.xlu0 %v808
      %v810 = vpop.xlane.xlu0 %809
      %v811 = vsel %vm687, %v771, 0.0
      %812 = vadd.xlane.f32.xlu0 %v811
      %v813 = vpop.xlane.xlu0 %812
      %v814 = vsel %vm687, %v773, 0.0
      %815 = vadd.xlane.f32.xlu0 %v814
      %v816 = vpop.xlane.xlu0 %815
      %v817 = vsel %vm687, %v775, 0.0
      %818 = vadd.xlane.f32.xlu0 %v817
      %v819 = vpop.xlane.xlu0 %818
      %v820 = vsel %vm687, %v777, 0.0
      %821 = vadd.xlane.f32.xlu0 %v820
      %v822 = vpop.xlane.xlu0 %821
      %v823 = vsel %vm687, %v779, 0.0
      %824 = vadd.xlane.f32.xlu0 %v823
      %v825 = vpop.xlane.xlu0 %824
      %v826 = vsel %vm687, %v781, 0.0
      %827 = vadd.xlane.f32.xlu0 %v826
      %v828 = vpop.xlane.xlu0 %827
      %v829 = vsel %vm687, %v783, 0.0
      %830 = vadd.xlane.f32.xlu0 %v829
      %v831 = vpop.xlane.xlu0 %830
      %v832 = vrcp.pop %v786
      %v833 = vrcp.pop %v789
      %v834 = vrcp.pop %v792
      %v835 = vrcp.pop %v795
      %v836 = vrcp.pop %v798
      %v837 = vrcp.pop %v801
      %v838 = vrcp.pop %v804
      %v839 = vrcp.pop %v807
      %v840 = vrcp.pop %v810
      %v841 = vrcp.pop %v813
      %v842 = vrcp.pop %v816
      %v843 = vrcp.pop %v819
      %v844 = vrcp.pop %v822
      %v845 = vrcp.pop %v825
      %v846 = vrcp.pop %v828
      %v847 = vrcp.pop %v831
      %v848 = vmul.f32 %v753, %v832
      %v849 = vmul.f32 %v755, %v833
      %v850 = vmul.f32 %v757, %v834
      %v851 = vmul.f32 %v759, %v835
      %v852 = vmul.f32 %v761, %v836
      %v853 = vmul.f32 %v763, %v837
      %v854 = vmul.f32 %v765, %v838
      %v855 = vmul.f32 %v767, %v839
      %v856 = vmul.f32 %v769, %v840
      %v857 = vmul.f32 %v771, %v841
      %v858 = vmul.f32 %v773, %v842
      %v859 = vmul.f32 %v775, %v843
      %v860 = vmul.f32 %v777, %v844
      %v861 = vmul.f32 %v779, %v845
      %v862 = vmul.f32 %v781, %v846
      %v863 = vmul.f32 %v783, %v847
      %v864 = vpack.c.bf16 %v849, %v848
      %v865 = vpack.c.bf16 %v851, %v850
      %v866 = vpack.c.bf16 %v853, %v852
      %v867 = vpack.c.bf16 %v855, %v854
      %v868 = vpack.c.bf16 %v857, %v856
      %v869 = vpack.c.bf16 %v859, %v858
      %v870 = vpack.c.bf16 %v861, %v860
      %v871 = vpack.c.bf16 %v863, %v862
      %v872 = vld [vmem:[%s347] sm:$0xf]
      %v873 = vld [vmem:[%s347 + $0x4] sm:$0xf]
      %v874 = vld [vmem:[%s347 + $0x8] sm:$0xf]
      %v875 = vld [vmem:[%s347 + $0xc] sm:$0xf]
      %v876 = vld [vmem:[%s347 + $0x10] sm:$0xf]
      %v877 = vld [vmem:[%s347 + $0x14] sm:$0xf]
      %v878 = vld [vmem:[%s347 + $0x18] sm:$0xf]
      %v879 = vld [vmem:[%s347 + $0x1c] sm:$0xf]
      %v888 = vunpack.c.l.b16 %v872
      %v889 = vunpack.c.l.b16 %v873
      %v890 = vunpack.c.l.b16 %v874
      %v891 = vunpack.c.l.b16 %v875
      %v892 = vunpack.c.l.b16 %v876
      %v893 = vunpack.c.l.b16 %v877
      %v894 = vunpack.c.l.b16 %v878
      %v895 = vunpack.c.l.b16 %v879
      %v896 = vpack.c.b16 %v889, %v888
      %v897 = vpack.c.b16 %v891, %v890
      %v898 = vpack.c.b16 %v893, %v892
      %v899 = vpack.c.b16 %v895, %v894
      %v905 = vsel %vm687, %v864, 0
      %v908 = vsel %vm687, %v865, 0
      %v911 = vsel %vm687, %v866, 0
      %v914 = vsel %vm687, %v867, 0
      %v917 = vsel %vm687, %v868, 0
      %v920 = vsel %vm687, %v869, 0
      %v923 = vsel %vm687, %v870, 0
      %v926 = vsel %vm687, %v871, 0
      %928 = vmatprep.subr.bf16.mxu0 0
      %929 = vmatpush1.bf16.msra.mxu0 0
      %930 = vmatprep.subr.bf16.mxu0 0
      %931 = vmatpush1.bf16.msra.mxu0 0
      %932 = vmatprep.subr.bf16.mxu0 0
      %933 = vmatpush1.bf16.msra.mxu0 0
      %934 = vmatprep.subr.bf16.mxu0 0
      %935 = vmatpush1.bf16.msra.mxu0 0
      %936 = vmatprep.subr.bf16.mxu0 0
      %937 = vmatpush1.bf16.msra.mxu0 %v899
      %938 = vmatprep.subr.bf16.mxu0 0
      %939 = vmatpush1.bf16.msra.mxu0 %v898
      %940 = vmatprep.subr.bf16.mxu0 0
      %941 = vmatpush1.bf16.msra.mxu0 %v897
      %942 = vmatprep.subr.bf16.mxu0 0
      %943 = vmatpush1.bf16.msra.mxu0 %v896
      %944 = vmatprep.subr.bf16.mxu0 0
      %945 = vmatpush2.bf16.msra.mxu0 0
      %946 = vmatprep.subr.bf16.mxu0 0
      %947 = vmatpush2.bf16.msra.mxu0 0
      %948 = vmatprep.subr.bf16.mxu0 0
      %949 = vmatpush2.bf16.msra.mxu0 0
      %950 = vmatprep.subr.bf16.mxu0 0
      %951 = vmatpush2.bf16.msra.mxu0 0
      %952 = vmatprep.subr.bf16.mxu0 0
      %953 = vmatpush2.bf16.msra.mxu0 0
      %954 = vmatprep.subr.bf16.mxu0 0
      %955 = vmatpush2.bf16.msra.mxu0 0
      %956 = vmatprep.subr.bf16.mxu0 0
      %957 = vmatpush2.bf16.msra.mxu0 0
      %958 = vmatprep.subr.bf16.mxu0 0
      %959 = vmatpush2.bf16.msra.mxu0 0
      %960 = vmatprep.mubr.bf16.mxu0 0
      %961 = vmatmul.mubr.bf16.gmra.mxu0 %v905
      %v962 = vpop.f32.mrf.mxu0
      %v963 = vadd.f32 0.0, %v962
      %v964 = vpop.f32.mrf.mxu0
      %v965 = vpop.f32.mrf.mxu0
      %v966 = vadd.f32 0.0, %v965
      %v967 = vpop.f32.mrf.mxu0
      %968 = vmatprep.mubr.bf16.mxu0 0
      %969 = vmatmul.mubr.bf16.gmra.mxu0 %v908
      %v970 = vpop.f32.mrf.mxu0
      %v971 = vadd.f32 0.0, %v970
      %v972 = vpop.f32.mrf.mxu0
      %v973 = vpop.f32.mrf.mxu0
      %v974 = vadd.f32 0.0, %v973
      %v975 = vpop.f32.mrf.mxu0
      %976 = vmatprep.mubr.bf16.mxu0 0
      %977 = vmatmul.mubr.bf16.gmra.mxu0 %v911
      %v978 = vpop.f32.mrf.mxu0
      %v979 = vadd.f32 0.0, %v978
      %v980 = vpop.f32.mrf.mxu0
      %v981 = vpop.f32.mrf.mxu0
      %v982 = vadd.f32 0.0, %v981
      %v983 = vpop.f32.mrf.mxu0
      %984 = vmatprep.mubr.bf16.mxu0 0
      %985 = vmatmul.mubr.bf16.gmra.mxu0 %v914
      %v986 = vpop.f32.mrf.mxu0
      %v987 = vadd.f32 0.0, %v986
      %v988 = vpop.f32.mrf.mxu0
      %v989 = vpop.f32.mrf.mxu0
      %v990 = vadd.f32 0.0, %v989
      %v991 = vpop.f32.mrf.mxu0
      %992 = vmatprep.mubr.bf16.mxu0 0
      %993 = vmatmul.mubr.bf16.gmra.mxu0 %v917
      %v994 = vpop.f32.mrf.mxu0
      %v995 = vadd.f32 0.0, %v994
      %v996 = vpop.f32.mrf.mxu0
      %v997 = vpop.f32.mrf.mxu0
      %v998 = vadd.f32 0.0, %v997
      %v999 = vpop.f32.mrf.mxu0
      %1000 = vmatprep.mubr.bf16.mxu0 0
      %1001 = vmatmul.mubr.bf16.gmra.mxu0 %v920
      %v1002 = vpop.f32.mrf.mxu0
      %v1003 = vadd.f32 0.0, %v1002
      %v1004 = vpop.f32.mrf.mxu0
      %v1005 = vpop.f32.mrf.mxu0
      %v1006 = vadd.f32 0.0, %v1005
      %v1007 = vpop.f32.mrf.mxu0
      %1008 = vmatprep.mubr.bf16.mxu0 0
      %1009 = vmatmul.mubr.bf16.gmra.mxu0 %v923
      %v1010 = vpop.f32.mrf.mxu0
      %v1011 = vadd.f32 0.0, %v1010
      %v1012 = vpop.f32.mrf.mxu0
      %v1013 = vpop.f32.mrf.mxu0
      %v1014 = vadd.f32 0.0, %v1013
      %v1015 = vpop.f32.mrf.mxu0
      %1016 = vmatprep.mubr.bf16.mxu0 0
      %1017 = vmatmul.mubr.bf16.gmra.mxu0 %v926
      %v1018 = vpop.f32.mrf.mxu0
      %v1019 = vadd.f32 0.0, %v1018
      %v1020 = vpop.f32.mrf.mxu0
      %v1021 = vpop.f32.mrf.mxu0
      %v1022 = vadd.f32 0.0, %v1021
      %v1023 = vpop.f32.mrf.mxu0
      %1024 = vdwg.mxu0
      %v1025 = vpack.c.bf16 %v966, %v963
      %v1026 = vpack.c.bf16 %v974, %v971
      %v1027 = vpack.c.bf16 %v982, %v979
      %v1028 = vpack.c.bf16 %v990, %v987
      %v1029 = vpack.c.bf16 %v998, %v995
      %v1030 = vpack.c.bf16 %v1006, %v1003
      %v1031 = vpack.c.bf16 %v1014, %v1011
      %v1032 = vpack.c.bf16 %v1022, %v1019
      %v1033 = vld [vmem:[%s4] sm:$0x3]
      %v1034 = vld [vmem:[%s6] sm:$0x1]
      %v1036 = vlaneseq
      %v1037 = vshrl.u32 %v1036, 7
      %v1038 = vsub.s32 0, %v1037
      %v1039 = vrot.slane %v1034, %v1038
      %v1042 = vsel %vm553, %v1025, 0
      %v1045 = vsel %vm553, %v1026, 0
      %v1048 = vsel %vm553, %v1027, 0
      %v1051 = vsel %vm553, %v1028, 0
      %v1054 = vsel %vm553, %v1029, 0
      %v1057 = vsel %vm553, %v1030, 0
      %v1060 = vsel %vm553, %v1031, 0
      %v1063 = vsel %vm553, %v1032, 0
      %vm1065 = vcmask 1041408
      %v1067 = vsel %vm1065, %v1033, 0
      %1069 = vmatprep.subr.bf16.mxu0 0
      %1070 = vmatpush1.bf16.msra.mxu0 0
      %1071 = vmatprep.subr.bf16.mxu0 0
      %1072 = vmatpush1.bf16.msra.mxu0 0
      %1073 = vmatprep.subr.bf16.mxu0 0
      %1074 = vmatpush1.bf16.msra.mxu0 0
      %1075 = vmatprep.subr.bf16.mxu0 0
      %1076 = vmatpush1.bf16.msra.mxu0 0
      %1077 = vmatprep.subr.bf16.mxu0 0
      %1078 = vmatpush1.bf16.msra.mxu0 0
      %1079 = vmatprep.subr.bf16.mxu0 0
      %1080 = vmatpush1.bf16.msra.mxu0 0
      %1081 = vmatprep.subr.bf16.mxu0 0
      %1082 = vmatpush1.bf16.msra.mxu0 0
      %1083 = vmatprep.subr.bf16.mxu0 0
      %1084 = vmatpush1.bf16.msra.mxu0 %v1067
      %1085 = vmatprep.subr.bf16.mxu0 0
      %1086 = vmatpush2.bf16.msra.mxu0 0
      %1087 = vmatprep.subr.bf16.mxu0 0
      %1088 = vmatpush2.bf16.msra.mxu0 0
      %1089 = vmatprep.subr.bf16.mxu0 0
      %1090 = vmatpush2.bf16.msra.mxu0 0
      %1091 = vmatprep.subr.bf16.mxu0 0
      %1092 = vmatpush2.bf16.msra.mxu0 0
      %1093 = vmatprep.subr.bf16.mxu0 0
      %1094 = vmatpush2.bf16.msra.mxu0 0
      %1095 = vmatprep.subr.bf16.mxu0 0
      %1096 = vmatpush2.bf16.msra.mxu0 0
      %1097 = vmatprep.subr.bf16.mxu0 0
      %1098 = vmatpush2.bf16.msra.mxu0 0
      %1099 = vmatprep.subr.bf16.mxu0 0
      %1100 = vmatpush2.bf16.msra.mxu0 0
      %1101 = vmatprep.mubr.bf16.mxu0 0
      %1102 = vmatmul.mubr.bf16.gmra.mxu0 %v1042
      %v1103 = vpop.f32.mrf.mxu0
      %v1104 = vadd.f32 %v1039, %v1103
      %v1105 = vpop.f32.mrf.mxu0
      %v1106 = vpop.f32.mrf.mxu0
      %v1107 = vadd.f32 %v1039, %v1106
      %v1108 = vpop.f32.mrf.mxu0
      %1109 = vmatprep.mubr.bf16.mxu0 0
      %1110 = vmatmul.mubr.bf16.gmra.mxu0 %v1045
      %v1111 = vpop.f32.mrf.mxu0
      %v1112 = vadd.f32 %v1039, %v1111
      %v1113 = vpop.f32.mrf.mxu0
      %v1114 = vpop.f32.mrf.mxu0
      %v1115 = vadd.f32 %v1039, %v1114
      %v1116 = vpop.f32.mrf.mxu0
      %1117 = vmatprep.mubr.bf16.mxu0 0
      %1118 = vmatmul.mubr.bf16.gmra.mxu0 %v1048
      %v1119 = vpop.f32.mrf.mxu0
      %v1120 = vadd.f32 %v1039, %v1119
      %v1121 = vpop.f32.mrf.mxu0
      %v1122 = vpop.f32.mrf.mxu0
      %v1123 = vadd.f32 %v1039, %v1122
      %v1124 = vpop.f32.mrf.mxu0
      %1125 = vmatprep.mubr.bf16.mxu0 0
      %1126 = vmatmul.mubr.bf16.gmra.mxu0 %v1051
      %v1127 = vpop.f32.mrf.mxu0
      %v1128 = vadd.f32 %v1039, %v1127
      %v1129 = vpop.f32.mrf.mxu0
      %v1130 = vpop.f32.mrf.mxu0
      %v1131 = vadd.f32 %v1039, %v1130
      %v1132 = vpop.f32.mrf.mxu0
      %1133 = vmatprep.mubr.bf16.mxu0 0
      %1134 = vmatmul.mubr.bf16.gmra.mxu0 %v1054
      %v1135 = vpop.f32.mrf.mxu0
      %v1136 = vadd.f32 %v1039, %v1135
      %v1137 = vpop.f32.mrf.mxu0
      %v1138 = vpop.f32.mrf.mxu0
      %v1139 = vadd.f32 %v1039, %v1138
      %v1140 = vpop.f32.mrf.mxu0
      %1141 = vmatprep.mubr.bf16.mxu0 0
      %1142 = vmatmul.mubr.bf16.gmra.mxu0 %v1057
      %v1143 = vpop.f32.mrf.mxu0
      %v1144 = vadd.f32 %v1039, %v1143
      %v1145 = vpop.f32.mrf.mxu0
      %v1146 = vpop.f32.mrf.mxu0
      %v1147 = vadd.f32 %v1039, %v1146
      %v1148 = vpop.f32.mrf.mxu0
      %1149 = vmatprep.mubr.bf16.mxu0 0
      %1150 = vmatmul.mubr.bf16.gmra.mxu0 %v1060
      %v1151 = vpop.f32.mrf.mxu0
      %v1152 = vadd.f32 %v1039, %v1151
      %v1153 = vpop.f32.mrf.mxu0
      %v1154 = vpop.f32.mrf.mxu0
      %v1155 = vadd.f32 %v1039, %v1154
      %v1156 = vpop.f32.mrf.mxu0
      %1157 = vmatprep.mubr.bf16.mxu0 0
      %1158 = vmatmul.mubr.bf16.gmra.mxu0 %v1063
      %v1159 = vpop.f32.mrf.mxu0
      %v1160 = vadd.f32 %v1039, %v1159
      %v1161 = vpop.f32.mrf.mxu0
      %v1162 = vpop.f32.mrf.mxu0
      %v1163 = vadd.f32 %v1039, %v1162
      %v1164 = vpop.f32.mrf.mxu0
      %1165 = vdwg.mxu0
      %v1166 = vadd.f32 %v1104, %v359
      %v1167 = vadd.f32 %v1107, %v360
      %v1168 = vadd.f32 %v1112, %v361
      %v1169 = vadd.f32 %v1115, %v362
      %v1170 = vadd.f32 %v1120, %v363
      %v1171 = vadd.f32 %v1123, %v364
      %v1172 = vadd.f32 %v1128, %v365
      %v1173 = vadd.f32 %v1131, %v366
      %v1174 = vadd.f32 %v1136, %v367
      %v1175 = vadd.f32 %v1139, %v368
      %v1176 = vadd.f32 %v1144, %v369
      %v1177 = vadd.f32 %v1147, %v370
      %v1178 = vadd.f32 %v1152, %v371
      %v1179 = vadd.f32 %v1155, %v372
      %v1180 = vadd.f32 %v1160, %v373
      %v1181 = vadd.f32 %v1163, %v374
      %1182 = vst.msk [vmem:[%s356] sm:$0xff] %vm391, %v1166
      %1183 = vst.msk [vmem:[%s356 + $0x8] sm:$0xff] %vm391, %v1167
      %1184 = vst.msk [vmem:[%s356 + $0x10] sm:$0xff] %vm391, %v1168
      %1185 = vst.msk [vmem:[%s356 + $0x18] sm:$0xff] %vm391, %v1169
      %1186 = vst.msk [vmem:[%s356 + $0x20] sm:$0xff] %vm391, %v1170
      %1187 = vst.msk [vmem:[%s356 + $0x28] sm:$0xff] %vm391, %v1171
      %1188 = vst.msk [vmem:[%s356 + $0x30] sm:$0xff] %vm391, %v1172
      %1189 = vst.msk [vmem:[%s356 + $0x38] sm:$0xff] %vm391, %v1173
      %1190 = vst.msk [vmem:[%s356 + $0x40] sm:$0xff] %vm391, %v1174
      %1191 = vst.msk [vmem:[%s356 + $0x48] sm:$0xff] %vm391, %v1175
      %1192 = vst.msk [vmem:[%s356 + $0x50] sm:$0xff] %vm391, %v1176
      %1193 = vst.msk [vmem:[%s356 + $0x58] sm:$0xff] %vm391, %v1177
      %1194 = vst.msk [vmem:[%s356 + $0x60] sm:$0xff] %vm391, %v1178
      %1195 = vst.msk [vmem:[%s356 + $0x68] sm:$0xff] %vm391, %v1179
      %1196 = vst.msk [vmem:[%s356 + $0x70] sm:$0xff] %vm391, %v1180
      %1197 = vst.msk [vmem:[%s356 + $0x78] sm:$0xff] %vm391, %v1181
      %s1198 = smul.u32 16, %s23
      %p1199 = scmp.lt.s32.totalorder %s22, 1
      %s1200 = scalar_select %p1199, %s22, 1
      %p1201 = scmp.lt.s32.totalorder %s1198, 31
      %s1202 = scalar_select %p1201, %s1198, 31
      %s1203 = smul.addr %s1200, 32
      %s1204 = sadd.s32 %s1202, %s1203
      %s1205 = smul.addr %s1204, 8
      %s1206 = scalar_lea.vmem %s7, %s1205
      // Predicated region
      $region49: #{space_nonlocal.1} parent=47 // pred_check
        %p1207 = pneg %p214
      $region50: #{space_nonlocal.1} parent=47 // pred_check_branch
        %1209 = sbr.rel (%p1207) target = $region52
      $region51: #{space_nonlocal.1} parent=47 // pred_region
        %s1210 = smul.u32 16, %s23
      $region52: #{space_nonlocal.1} parent=47 // pred_fallthru
        _
    $region48: #{space_nonlocal.1} parent=5 // pred_fallthru
      _
    %p1211 = scmp.le.s32.totalorder 2, %s13
    // Predicated region
    $region53: #{space_nonlocal.1} parent=5 // pred_check
      %p1212 = pneg %p1211
    $region54: #{space_nonlocal.1} parent=5 // pred_check_branch
      %1214 = sbr.rel (%p1212) target = $region56
    $region55: #{space_nonlocal.1} parent=5 // pred_region
      %s1215 = ssub.s32 %s13, 2
      // Predicated region
      $region57: #{space_nonlocal.1} parent=55 // pred_check
        %p1216 = pneg %p220
      $region58: #{space_nonlocal.1} parent=55 // pred_check_branch
        %1218 = sbr.rel (%p1216) target = $region60
      $region59: #{space_nonlocal.1} parent=55 // pred_region
        %s1219 = smul.u32 16, %s25
        %p1220 = scmp.lt.s32.totalorder %s24, 1
        %s1221 = scalar_select %p1220, %s24, 1
        %p1222 = scmp.lt.s32.totalorder %s1219, 31
        %s1223 = scalar_select %p1222, %s1219, 31
        %s1224 = smul.addr %s1221, 32
        %s1225 = sadd.s32 %s1223, %s1224
        %s1226 = smul.addr %s1225, 8
        %s1227 = scalar_lea.vmem %s7, %s1226
      $region60: #{space_nonlocal.1} parent=55 // pred_fallthru
        _
    $region56: #{space_nonlocal.1} parent=5 // pred_fallthru
      _
  $region6: #{space_nonlocal.1} parent=0 // loop_footer
    %s17 = sadd.s32 1, %s13
  $region7: #{space_nonlocal.1} parent=0 // loop_footer_branch
    %12 = sbr.rel target = $region3
  $region8: #{space_nonlocal.1} parent=0 // loop_exit
    _

</llo_original>
